<compile_context>
chip_gen: v6e
topology: v6e:2x2x1
jax: 0.10.0
libtpu: 0.0.40
codegen_flags: <defaults>
</compile_context>

<pallas_src>
import math
from functools import partial

import jax
import jax.numpy as jnp
from jax.experimental import pallas as pl
from jax.experimental.pallas import tpu as pltpu

EPS = 1e-5  # nn.LayerNorm default eps


def _layernorm(x, g, b):
    mu = jnp.mean(x, axis=-1, keepdims=True)
    var = jnp.mean((x - mu) ** 2, axis=-1, keepdims=True)  # biased variance, as in PyTorch LN
    return (x - mu) * jax.lax.rsqrt(var + EPS) * g + b


# ---------------------------------------------------------------------------
# Fused kernel: one grid step = (batch row b, layer l)
# ---------------------------------------------------------------------------
def tiny_transformer_kernel(num_heads,
                            x_ref,
                            in_w_ref, in_b_ref, out_w_ref, out_b_ref,
                            ln1_g_ref, ln1_b_ref,
                            w1_ref, b1_ref, w2_ref, b2_ref,
                            ln2_g_ref, ln2_b_ref,
                            fc_w_ref, fc_b_ref,
                            o_ref,
                            x_scr):
    S, E = x_scr.shape
    H = num_heads
    Dh = E // H
    scale = 1.0 / math.sqrt(Dh)
    l = pl.program_id(1)

    # Load the embedded input into the layer-carry scratch at the first layer of this batch row.
    @pl.when(l == 0)
    def _():
        x_scr[...] = x_ref[...]

    x = x_scr[...]                                            # (S, E) f32

    # ---------------- multi-head self-attention (per-batch-row, no mask needed) ----------------
    in_w = in_w_ref[...]                                      # (E, 3E) bf16, pre-transposed
    qkv = jnp.dot(x.astype(in_w.dtype), in_w,
                  preferred_element_type=jnp.float32) + in_b_ref[...]        # (S, 3E) f32
    q = qkv[:, :E] * scale
    k = qkv[:, E:2 * E]
    v = qkv[:, 2 * E:]

    w_o = out_w_ref[...]                                      # (E, E) bf16, pre-transposed
    attn = jnp.zeros((S, E), jnp.float32)
    for h in range(H):                                        # static, H small
        lo = h * Dh
        qh = q[:, lo:lo + Dh]
        kh = k[:, lo:lo + Dh]
        vh = v[:, lo:lo + Dh]
        # q . k^T without an explicit transpose (contract last dims of both)
        s = jax.lax.dot_general(qh, kh, (((1,), (1,)), ((), ())),
                                preferred_element_type=jnp.float32)          # (S, S) f32
        s = s - jnp.max(s, axis=-1, keepdims=True)
        p = jnp.exp(s)
        p = p / jnp.sum(p, axis=-1, keepdims=True)            # exact softmax (parity with torch)
        head_o = jnp.dot(p, vh, preferred_element_type=jnp.float32)          # (S, Dh) f32
        # concat(heads) @ W_o == sum_h head_h @ W_o[h*Dh:(h+1)*Dh, :]  (no lane concatenate)
        attn = attn + jnp.dot(head_o.astype(w_o.dtype), w_o[lo:lo + Dh, :],
                              preferred_element_type=jnp.float32)
    attn = attn + out_b_ref[...]

    # residual + norm1 (post-norm, PyTorch default)
    x = _layernorm(x + attn, ln1_g_ref[...], ln1_b_ref[...])

    # ---------------- feed-forward (ReLU) ----------------
    w1 = w1_ref[...]                                          # (E, F) bf16
    w2 = w2_ref[...]                                          # (F, E) bf16
    h1 = jnp.maximum(jnp.dot(x.astype(w1.dtype), w1,
                             preferred_element_type=jnp.float32) + b1_ref[...], 0.0)
    ff = jnp.dot(h1.astype(w2.dtype), w2,
                 preferred_element_type=jnp.float32) + b2_ref[...]

    # residual + norm2
    x = _layernorm(x + ff, ln2_g_ref[...], ln2_b_ref[...])
    x_scr[...] = x                                            # carry to next layer step

    # ---------------- epilogue on the last layer: fc per token, then mean-pool, sigmoid ----------
    @pl.when(l == pl.num_programs(1) - 1)
    def _():
        tok = jnp.dot(x, fc_w_ref[...], preferred_element_type=jnp.float32)  # (S, 1)
        logit = jnp.sum(tok, axis=0, keepdims=True) * (1.0 / S) + fc_b_ref[...]
        o_ref[...] = 1.0 / (1.0 + jnp.exp(-logit))            # sigmoid, (1, 1)


# ---------------------------------------------------------------------------
# Wrapper: one pallas_call for the whole model, grid = (batch, layers)
# ---------------------------------------------------------------------------
def forward(token_ids, params, num_heads):
    B, S = token_ids.shape
    E = params["emb"].shape[1]
    L = params["w1_t"].shape[0]
    assert S <= params["pos"].shape[1], "sequence longer than positional-encoding table (512)"

    # embedding gather + positional add: one small XLA op feeding the fused kernel directly
    x = (params["emb"][token_ids] + params["pos"][:, :S, :]).astype(jnp.float32)   # (B, S, E)

    def per_layer(arr):   # stream layer l's slab; pipeline prefetches layer l+1 during layer l
        return pl.BlockSpec((None,) + arr.shape[1:], lambda b, l: (l, 0, 0))

    def whole2d(arr):     # small 2-D params resident for the whole call
        return pl.BlockSpec(arr.shape, lambda b, l: (0, 0))

    kernel = partial(tiny_transformer_kernel, num_heads)
    out = pl.pallas_call(
        kernel,
        out_shape=jax.ShapeDtypeStruct((B, 1, 1), jnp.float32),
        grid=(B, L),
        in_specs=[
            pl.BlockSpec((None, S, E), lambda b, l: (b, 0, 0)),   # embedded input, per batch row
            per_layer(params["in_w_t"]), per_layer(params["in_b"]),
            per_layer(params["out_w_t"]), per_layer(params["out_b"]),
            per_layer(params["ln1_g"]), per_layer(params["ln1_b"]),
            per_layer(params["w1_t"]), per_layer(params["b1"]),
            per_layer(params["w2_t"]), per_layer(params["b2"]),
            per_layer(params["ln2_g"]), per_layer(params["ln2_b"]),
            whole2d(params["fc_w_t"]), whole2d(params["fc_b"]),
        ],
        out_specs=pl.BlockSpec((None, 1, 1), lambda b, l: (b, 0, 0)),
        scratch_shapes=[pltpu.VMEM((S, E), jnp.float32)],         # layer-to-layer activation carry
        compiler_params=pltpu.CompilerParams(
            dimension_semantics=("parallel", "arbitrary"),        # batch parallel, layers sequential
            vmem_limit_bytes=32 * 1024 * 1024,                    # explicit budget; safe on v5e/v6e/v7x
        ),
    )(x,
      params["in_w_t"], params["in_b"], params["out_w_t"], params["out_b"],
      params["ln1_g"], params["ln1_b"],
      params["w1_t"], params["b1"], params["w2_t"], params["b2"],
      params["ln2_g"], params["ln2_b"],
      params["fc_w_t"], params["fc_b"])
    return out.reshape(B, 1)


# ---------------------------------------------------------------------------
# Parameter construction (deterministic, synthetic) — stored kernel-ready:
# matmul weights pre-transposed to (in, out), stacked over layers, cast to bf16.
# ---------------------------------------------------------------------------
def init_params(key, vocab_size, embed_dim, num_heads, ff_dim, num_layers):
    E, F, L = embed_dim, ff_dim, num_layers
    keys = iter(jax.random.split(key, 4 + 8 * L))

    def w(shape, scale=0.05):
        return (scale * jax.random.normal(next(keys), shape)).astype(jnp.float32)

    layers = []
    for _ in range(L):
        layers.append({
            "in_w": w((3 * E, E)), "in_b": w((1, 3 * E)),
            "out_w": w((E, E)), "out_b": w((1, E)),
            "ln1_g": jnp.ones((1, E), jnp.float32), "ln1_b": jnp.zeros((1, E), jnp.float32),
            "w1": w((F, E)), "b1": w((1, F)),
            "w2": w((E, F)), "b2": w((1, E)),
            "ln2_g": jnp.ones((1, E), jnp.float32), "ln2_b": jnp.zeros((1, E), jnp.float32),
        })

    def stack(name):
        return jnp.stack([lp[name] for lp in layers])

    def stack_t_bf16(name):
        return jnp.stack([lp[name].T for lp in layers]).astype(jnp.bfloat16)

    return {
        "emb": w((vocab_size, E)),
        "pos": jnp.zeros((1, 512, E), jnp.float32),   # nn.Parameter(torch.zeros(1, 512, E))
        "fc_w_t": w((1, E)).T,                        # (E, 1) f32
        "fc_b": w((1, 1)),
        "in_w_t": stack_t_bf16("in_w"),               # (L, E, 3E) bf16
        "in_b": stack("in_b"),                        # (L, 1, 3E) f32
        "out_w_t": stack_t_bf16("out_w"),             # (L, E, E)  bf16
        "out_b": stack("out_b"),                      # (L, 1, E)  f32
        "ln1_g": stack("ln1_g"), "ln1_b": stack("ln1_b"),
        "w1_t": stack_t_bf16("w1"),                   # (L, E, F)  bf16
        "b1": stack("b1"),                            # (L, 1, F)  f32
        "w2_t": stack_t_bf16("w2"),                   # (L, F, E)  bf16
        "b2": stack("b2"),                            # (L, 1, E)  f32
        "ln2_g": stack("ln2_g"), "ln2_b": stack("ln2_b"),
    }


if __name__ == "__main__":
    VOCAB, EMBED, HEADS, FF, LAYERS = 100, 32, 4, 64, 2
    BATCH, SEQ = 2, 8

    key = jax.random.PRNGKey(0)
    k_tok, k_par = jax.random.split(key)
    params = init_params(k_par, VOCAB, EMBED, HEADS, FF, LAYERS)
    token_ids = jax.random.randint(k_tok, (BATCH, SEQ), 0, VOCAB, dtype=jnp.int32)

    fwd = jax.jit(partial(forward, num_heads=HEADS))
    out = fwd(token_ids, params)
    jax.block_until_ready(out)
    assert out.shape == (BATCH, 1)
    assert bool(jnp.all(jnp.isfinite(out)))
    print("KERNEL_OK")
</pallas_src>

<mosaic_0001>
module attributes {stable_mosaic.version = 11 : i64} {
  func.func @tiny_transformer_kernel(%arg0: i32, %arg1: i32, %arg2: memref<1x8x32xf32, #tpu.memory_space<vmem>>, %arg3: memref<1x32x96xbf16, #tpu.memory_space<vmem>>, %arg4: memref<1x1x96xf32, #tpu.memory_space<vmem>>, %arg5: memref<1x32x32xbf16, #tpu.memory_space<vmem>>, %arg6: memref<1x1x32xf32, #tpu.memory_space<vmem>>, %arg7: memref<1x1x32xf32, #tpu.memory_space<vmem>>, %arg8: memref<1x1x32xf32, #tpu.memory_space<vmem>>, %arg9: memref<1x32x64xbf16, #tpu.memory_space<vmem>>, %arg10: memref<1x1x64xf32, #tpu.memory_space<vmem>>, %arg11: memref<1x64x32xbf16, #tpu.memory_space<vmem>>, %arg12: memref<1x1x32xf32, #tpu.memory_space<vmem>>, %arg13: memref<1x1x32xf32, #tpu.memory_space<vmem>>, %arg14: memref<1x1x32xf32, #tpu.memory_space<vmem>>, %arg15: memref<32x1xf32, #tpu.memory_space<vmem>>, %arg16: memref<1x1xf32, #tpu.memory_space<vmem>>, %arg17: memref<1x1x1xf32, #tpu.memory_space<vmem>>, %arg18: memref<8x32xf32, #tpu.memory_space<vmem>>) attributes {dimension_semantics = [#tpu.dimension_semantics<parallel>, #tpu.dimension_semantics<arbitrary>], iteration_bounds = array<i64: 2, 2>, scalar_prefetch = 0 : i64, scratch_operands = 1 : i64, tpu.core_type = #tpu.core_type<tc>, window_params = [{transform_indices = @transform_0, window_bounds = array<i64: 1, 8, 32>}, {transform_indices = @transform_1, window_bounds = array<i64: 1, 32, 96>}, {transform_indices = @transform_2, window_bounds = array<i64: 1, 1, 96>}, {transform_indices = @transform_3, window_bounds = array<i64: 1, 32, 32>}, {transform_indices = @transform_4, window_bounds = array<i64: 1, 1, 32>}, {transform_indices = @transform_5, window_bounds = array<i64: 1, 1, 32>}, {transform_indices = @transform_6, window_bounds = array<i64: 1, 1, 32>}, {transform_indices = @transform_7, window_bounds = array<i64: 1, 32, 64>}, {transform_indices = @transform_8, window_bounds = array<i64: 1, 1, 64>}, {transform_indices = @transform_9, window_bounds = array<i64: 1, 64, 32>}, {transform_indices = @transform_10, window_bounds = array<i64: 1, 1, 32>}, {transform_indices = @transform_11, window_bounds = array<i64: 1, 1, 32>}, {transform_indices = @transform_12, window_bounds = array<i64: 1, 1, 32>}, {pipeline_mode = #tpu.pipeline_mode<synchronous>, transform_indices = @transform_13, window_bounds = array<i64: 32, 1>}, {pipeline_mode = #tpu.pipeline_mode<synchronous>, transform_indices = @transform_14, window_bounds = array<i64: 1, 1>}, {transform_indices = @transform_15, window_bounds = array<i64: 1, 1, 1>}]} {
    %c0_i32 = arith.constant 0 : i32
    %0 = arith.cmpi eq, %arg1, %c0_i32 : i32
    %1 = arith.extui %0 : i1 to i32
    %c0_i32_0 = arith.constant 0 : i32
    %2 = arith.cmpi ne, %1, %c0_i32_0 : i32
    scf.if %2 {
      %c0_76 = arith.constant 0 : index
      %c0_77 = arith.constant 0 : index
      %c0_78 = arith.constant 0 : index
      %172 = vector.load %arg2[%c0_76, %c0_77, %c0_78] : memref<1x8x32xf32, #tpu.memory_space<vmem>>, vector<1x8x32xf32>
      %173 = vector.shape_cast %172 : vector<1x8x32xf32> to vector<8x32xf32>
      %c0_79 = arith.constant 0 : index
      %c0_80 = arith.constant 0 : index
      %174 = vector.load %arg18[%c0_79, %c0_80] : memref<8x32xf32, #tpu.memory_space<vmem>>, vector<8x32xf32>
      tpu.vector_store %arg18[%c0_79, %c0_80], %173 {strides = array<i32>} : memref<8x32xf32, #tpu.memory_space<vmem>>, vector<8x32xf32>,
    } else {
    }
    %c0 = arith.constant 0 : index
    %c0_1 = arith.constant 0 : index
    %3 = vector.load %arg18[%c0, %c0_1] : memref<8x32xf32, #tpu.memory_space<vmem>>, vector<8x32xf32>
    %c0_2 = arith.constant 0 : index
    %c0_3 = arith.constant 0 : index
    %c0_4 = arith.constant 0 : index
    %4 = vector.load %arg3[%c0_2, %c0_3, %c0_4] : memref<1x32x96xbf16, #tpu.memory_space<vmem>>, vector<1x32x96xbf16>
    %5 = vector.shape_cast %4 : vector<1x32x96xbf16> to vector<32x96xbf16>
    %6 = arith.truncf %3 : vector<8x32xf32> to vector<8x32xbf16>
    %cst = arith.constant dense<0.000000e+00> : vector<8x96xf32>
    %7 = tpu.matmul %6, %5, %cst {dimension_numbers = #tpu.dot_dimension_numbers<[1], [0], [0], [1], [0, 0, 1, 1], [], []>} : vector<8x32xbf16>, vector<32x96xbf16>, vector<8x96xf32> -> vector<8x96xf32>
    %c0_5 = arith.constant 0 : index
    %c0_6 = arith.constant 0 : index
    %c0_7 = arith.constant 0 : index
    %8 = vector.load %arg4[%c0_5, %c0_6, %c0_7] : memref<1x1x96xf32, #tpu.memory_space<vmem>>, vector<1x1x96xf32>
    %9 = vector.shape_cast %8 : vector<1x1x96xf32> to vector<1x96xf32>
    %10 = vector.broadcast %9 : vector<1x96xf32> to vector<8x96xf32>
    %11 = arith.addf %7, %10 : vector<8x96xf32>
    %12 = vector.extract_strided_slice %11 {offsets = [0, 0], sizes = [8, 32], strides = [1, 1]} : vector<8x96xf32> to vector<8x32xf32>
    %cst_8 = arith.constant 0.353553385 : f32
    %13 = vector.broadcast %cst_8 : f32 to vector<8x32xf32>
    %14 = arith.mulf %12, %13 : vector<8x32xf32>
    %15 = vector.extract_strided_slice %11 {offsets = [0, 32], sizes = [8, 32], strides = [1, 1]} : vector<8x96xf32> to vector<8x32xf32>
    %16 = vector.extract_strided_slice %11 {offsets = [0, 64], sizes = [8, 32], strides = [1, 1]} : vector<8x96xf32> to vector<8x32xf32>
    %c0_9 = arith.constant 0 : index
    %c0_10 = arith.constant 0 : index
    %c0_11 = arith.constant 0 : index
    %17 = vector.load %arg5[%c0_9, %c0_10, %c0_11] : memref<1x32x32xbf16, #tpu.memory_space<vmem>>, vector<1x32x32xbf16>
    %18 = vector.shape_cast %17 : vector<1x32x32xbf16> to vector<32x32xbf16>
    %cst_12 = arith.constant 0.000000e+00 : f32
    %19 = vector.broadcast %cst_12 : f32 to vector<8x32xf32>
    %20 = vector.extract_strided_slice %14 {offsets = [0, 0], sizes = [8, 8], strides = [1, 1]} : vector<8x32xf32> to vector<8x8xf32>
    %21 = vector.extract_strided_slice %15 {offsets = [0, 0], sizes = [8, 8], strides = [1, 1]} : vector<8x32xf32> to vector<8x8xf32>
    %22 = vector.extract_strided_slice %16 {offsets = [0, 0], sizes = [8, 8], strides = [1, 1]} : vector<8x32xf32> to vector<8x8xf32>
    %cst_13 = arith.constant dense<0.000000e+00> : vector<8x8xf32>
    %23 = tpu.matmul %20, %21, %cst_13 {dimension_numbers = #tpu.dot_dimension_numbers<[1], [1], [0], [0], [0, 0, 1, 0], [], []>} : vector<8x8xf32>, vector<8x8xf32>, vector<8x8xf32> -> vector<8x8xf32>
    %cst_14 = arith.constant dense<0xFF800000> : vector<8xf32>
    %24 = vector.multi_reduction <maximumf>, %23, %cst_14 [1] : vector<8x8xf32> to vector<8xf32>
    %25 = vector.shape_cast %24 : vector<8xf32> to vector<8x1xf32>
    %26 = vector.broadcast %25 : vector<8x1xf32> to vector<8x8xf32>
    %27 = arith.subf %23, %26 : vector<8x8xf32>
    %28 = math.exp %27 : vector<8x8xf32>
    %cst_15 = arith.constant dense<0.000000e+00> : vector<8xf32>
    %29 = vector.multi_reduction <add>, %28, %cst_15 [1] : vector<8x8xf32> to vector<8xf32>
    %30 = vector.shape_cast %29 : vector<8xf32> to vector<8x1xf32>
    %31 = vector.broadcast %30 : vector<8x1xf32> to vector<8x8xf32>
    %32 = arith.divf %28, %31 : vector<8x8xf32>
    %cst_16 = arith.constant dense<0.000000e+00> : vector<8x8xf32>
    %33 = tpu.matmul %32, %22, %cst_16 {dimension_numbers = #tpu.dot_dimension_numbers<[1], [0], [0], [1], [0, 0, 1, 1], [], []>} : vector<8x8xf32>, vector<8x8xf32>, vector<8x8xf32> -> vector<8x8xf32>
    %34 = arith.truncf %33 : vector<8x8xf32> to vector<8x8xbf16>
    %35 = vector.extract_strided_slice %18 {offsets = [0, 0], sizes = [8, 32], strides = [1, 1]} : vector<32x32xbf16> to vector<8x32xbf16>
    %cst_17 = arith.constant dense<0.000000e+00> : vector<8x32xf32>
    %36 = tpu.matmul %34, %35, %cst_17 {dimension_numbers = #tpu.dot_dimension_numbers<[1], [0], [0], [1], [0, 0, 1, 1], [], []>} : vector<8x8xbf16>, vector<8x32xbf16>, vector<8x32xf32> -> vector<8x32xf32>
    %37 = arith.addf %19, %36 : vector<8x32xf32>
    %38 = vector.extract_strided_slice %14 {offsets = [0, 8], sizes = [8, 8], strides = [1, 1]} : vector<8x32xf32> to vector<8x8xf32>
    %39 = vector.extract_strided_slice %15 {offsets = [0, 8], sizes = [8, 8], strides = [1, 1]} : vector<8x32xf32> to vector<8x8xf32>
    %40 = vector.extract_strided_slice %16 {offsets = [0, 8], sizes = [8, 8], strides = [1, 1]} : vector<8x32xf32> to vector<8x8xf32>
    %cst_18 = arith.constant dense<0.000000e+00> : vector<8x8xf32>
    %41 = tpu.matmul %38, %39, %cst_18 {dimension_numbers = #tpu.dot_dimension_numbers<[1], [1], [0], [0], [0, 0, 1, 0], [], []>} : vector<8x8xf32>, vector<8x8xf32>, vector<8x8xf32> -> vector<8x8xf32>
    %cst_19 = arith.constant dense<0xFF800000> : vector<8xf32>
    %42 = vector.multi_reduction <maximumf>, %41, %cst_19 [1] : vector<8x8xf32> to vector<8xf32>
    %43 = vector.shape_cast %42 : vector<8xf32> to vector<8x1xf32>
    %44 = vector.broadcast %43 : vector<8x1xf32> to vector<8x8xf32>
    %45 = arith.subf %41, %44 : vector<8x8xf32>
    %46 = math.exp %45 : vector<8x8xf32>
    %cst_20 = arith.constant dense<0.000000e+00> : vector<8xf32>
    %47 = vector.multi_reduction <add>, %46, %cst_20 [1] : vector<8x8xf32> to vector<8xf32>
    %48 = vector.shape_cast %47 : vector<8xf32> to vector<8x1xf32>
    %49 = vector.broadcast %48 : vector<8x1xf32> to vector<8x8xf32>
    %50 = arith.divf %46, %49 : vector<8x8xf32>
    %cst_21 = arith.constant dense<0.000000e+00> : vector<8x8xf32>
    %51 = tpu.matmul %50, %40, %cst_21 {dimension_numbers = #tpu.dot_dimension_numbers<[1], [0], [0], [1], [0, 0, 1, 1], [], []>} : vector<8x8xf32>, vector<8x8xf32>, vector<8x8xf32> -> vector<8x8xf32>
    %52 = arith.truncf %51 : vector<8x8xf32> to vector<8x8xbf16>
    %53 = vector.extract_strided_slice %18 {offsets = [8, 0], sizes = [8, 32], strides = [1, 1]} : vector<32x32xbf16> to vector<8x32xbf16>
    %cst_22 = arith.constant dense<0.000000e+00> : vector<8x32xf32>
    %54 = tpu.matmul %52, %53, %cst_22 {dimension_numbers = #tpu.dot_dimension_numbers<[1], [0], [0], [1], [0, 0, 1, 1], [], []>} : vector<8x8xbf16>, vector<8x32xbf16>, vector<8x32xf32> -> vector<8x32xf32>
    %55 = arith.addf %37, %54 : vector<8x32xf32>
    %56 = vector.extract_strided_slice %14 {offsets = [0, 16], sizes = [8, 8], strides = [1, 1]} : vector<8x32xf32> to vector<8x8xf32>
    %57 = vector.extract_strided_slice %15 {offsets = [0, 16], sizes = [8, 8], strides = [1, 1]} : vector<8x32xf32> to vector<8x8xf32>
    %58 = vector.extract_strided_slice %16 {offsets = [0, 16], sizes = [8, 8], strides = [1, 1]} : vector<8x32xf32> to vector<8x8xf32>
    %cst_23 = arith.constant dense<0.000000e+00> : vector<8x8xf32>
    %59 = tpu.matmul %56, %57, %cst_23 {dimension_numbers = #tpu.dot_dimension_numbers<[1], [1], [0], [0], [0, 0, 1, 0], [], []>} : vector<8x8xf32>, vector<8x8xf32>, vector<8x8xf32> -> vector<8x8xf32>
    %cst_24 = arith.constant dense<0xFF800000> : vector<8xf32>
    %60 = vector.multi_reduction <maximumf>, %59, %cst_24 [1] : vector<8x8xf32> to vector<8xf32>
    %61 = vector.shape_cast %60 : vector<8xf32> to vector<8x1xf32>
    %62 = vector.broadcast %61 : vector<8x1xf32> to vector<8x8xf32>
    %63 = arith.subf %59, %62 : vector<8x8xf32>
    %64 = math.exp %63 : vector<8x8xf32>
    %cst_25 = arith.constant dense<0.000000e+00> : vector<8xf32>
    %65 = vector.multi_reduction <add>, %64, %cst_25 [1] : vector<8x8xf32> to vector<8xf32>
    %66 = vector.shape_cast %65 : vector<8xf32> to vector<8x1xf32>
    %67 = vector.broadcast %66 : vector<8x1xf32> to vector<8x8xf32>
    %68 = arith.divf %64, %67 : vector<8x8xf32>
    %cst_26 = arith.constant dense<0.000000e+00> : vector<8x8xf32>
    %69 = tpu.matmul %68, %58, %cst_26 {dimension_numbers = #tpu.dot_dimension_numbers<[1], [0], [0], [1], [0, 0, 1, 1], [], []>} : vector<8x8xf32>, vector<8x8xf32>, vector<8x8xf32> -> vector<8x8xf32>
    %70 = arith.truncf %69 : vector<8x8xf32> to vector<8x8xbf16>
    %71 = vector.extract_strided_slice %18 {offsets = [16, 0], sizes = [8, 32], strides = [1, 1]} : vector<32x32xbf16> to vector<8x32xbf16>
    %cst_27 = arith.constant dense<0.000000e+00> : vector<8x32xf32>
    %72 = tpu.matmul %70, %71, %cst_27 {dimension_numbers = #tpu.dot_dimension_numbers<[1], [0], [0], [1], [0, 0, 1, 1], [], []>} : vector<8x8xbf16>, vector<8x32xbf16>, vector<8x32xf32> -> vector<8x32xf32>
    %73 = arith.addf %55, %72 : vector<8x32xf32>
    %74 = vector.extract_strided_slice %14 {offsets = [0, 24], sizes = [8, 8], strides = [1, 1]} : vector<8x32xf32> to vector<8x8xf32>
    %75 = vector.extract_strided_slice %15 {offsets = [0, 24], sizes = [8, 8], strides = [1, 1]} : vector<8x32xf32> to vector<8x8xf32>
    %76 = vector.extract_strided_slice %16 {offsets = [0, 24], sizes = [8, 8], strides = [1, 1]} : vector<8x32xf32> to vector<8x8xf32>
    %cst_28 = arith.constant dense<0.000000e+00> : vector<8x8xf32>
    %77 = tpu.matmul %74, %75, %cst_28 {dimension_numbers = #tpu.dot_dimension_numbers<[1], [1], [0], [0], [0, 0, 1, 0], [], []>} : vector<8x8xf32>, vector<8x8xf32>, vector<8x8xf32> -> vector<8x8xf32>
    %cst_29 = arith.constant dense<0xFF800000> : vector<8xf32>
    %78 = vector.multi_reduction <maximumf>, %77, %cst_29 [1] : vector<8x8xf32> to vector<8xf32>
    %79 = vector.shape_cast %78 : vector<8xf32> to vector<8x1xf32>
    %80 = vector.broadcast %79 : vector<8x1xf32> to vector<8x8xf32>
    %81 = arith.subf %77, %80 : vector<8x8xf32>
    %82 = math.exp %81 : vector<8x8xf32>
    %cst_30 = arith.constant dense<0.000000e+00> : vector<8xf32>
    %83 = vector.multi_reduction <add>, %82, %cst_30 [1] : vector<8x8xf32> to vector<8xf32>
    %84 = vector.shape_cast %83 : vector<8xf32> to vector<8x1xf32>
    %85 = vector.broadcast %84 : vector<8x1xf32> to vector<8x8xf32>
    %86 = arith.divf %82, %85 : vector<8x8xf32>
    %cst_31 = arith.constant dense<0.000000e+00> : vector<8x8xf32>
    %87 = tpu.matmul %86, %76, %cst_31 {dimension_numbers = #tpu.dot_dimension_numbers<[1], [0], [0], [1], [0, 0, 1, 1], [], []>} : vector<8x8xf32>, vector<8x8xf32>, vector<8x8xf32> -> vector<8x8xf32>
    %88 = arith.truncf %87 : vector<8x8xf32> to vector<8x8xbf16>
    %89 = vector.extract_strided_slice %18 {offsets = [24, 0], sizes = [8, 32], strides = [1, 1]} : vector<32x32xbf16> to vector<8x32xbf16>
    %cst_32 = arith.constant dense<0.000000e+00> : vector<8x32xf32>
    %90 = tpu.matmul %88, %89, %cst_32 {dimension_numbers = #tpu.dot_dimension_numbers<[1], [0], [0], [1], [0, 0, 1, 1], [], []>} : vector<8x8xbf16>, vector<8x32xbf16>, vector<8x32xf32> -> vector<8x32xf32>
    %91 = arith.addf %73, %90 : vector<8x32xf32>
    %c0_33 = arith.constant 0 : index
    %c0_34 = arith.constant 0 : index
    %c0_35 = arith.constant 0 : index
    %92 = vector.load %arg6[%c0_33, %c0_34, %c0_35] : memref<1x1x32xf32, #tpu.memory_space<vmem>>, vector<1x1x32xf32>
    %93 = vector.shape_cast %92 : vector<1x1x32xf32> to vector<1x32xf32>
    %94 = vector.broadcast %93 : vector<1x32xf32> to vector<8x32xf32>
    %95 = arith.addf %91, %94 : vector<8x32xf32>
    %96 = arith.addf %3, %95 : vector<8x32xf32>
    %c0_36 = arith.constant 0 : index
    %c0_37 = arith.constant 0 : index
    %c0_38 = arith.constant 0 : index
    %97 = vector.load %arg7[%c0_36, %c0_37, %c0_38] : memref<1x1x32xf32, #tpu.memory_space<vmem>>, vector<1x1x32xf32>
    %98 = vector.shape_cast %97 : vector<1x1x32xf32> to vector<1x32xf32>
    %c0_39 = arith.constant 0 : index
    %c0_40 = arith.constant 0 : index
    %c0_41 = arith.constant 0 : index
    %99 = vector.load %arg8[%c0_39, %c0_40, %c0_41] : memref<1x1x32xf32, #tpu.memory_space<vmem>>, vector<1x1x32xf32>
    %100 = vector.shape_cast %99 : vector<1x1x32xf32> to vector<1x32xf32>
    %cst_42 = arith.constant dense<0.000000e+00> : vector<8xf32>
    %101 = vector.multi_reduction <add>, %96, %cst_42 [1] : vector<8x32xf32> to vector<8xf32>
    %102 = vector.shape_cast %101 : vector<8xf32> to vector<8x1xf32>
    %cst_43 = arith.constant 3.200000e+01 : f32
    %103 = vector.broadcast %cst_43 : f32 to vector<8x1xf32>
    %104 = arith.divf %102, %103 : vector<8x1xf32>
    %105 = vector.broadcast %104 : vector<8x1xf32> to vector<8x32xf32>
    %106 = arith.subf %96, %105 : vector<8x32xf32>
    %107 = arith.mulf %106, %106 : vector<8x32xf32>
    %cst_44 = arith.constant dense<0.000000e+00> : vector<8xf32>
    %108 = vector.multi_reduction <add>, %107, %cst_44 [1] : vector<8x32xf32> to vector<8xf32>
    %109 = vector.shape_cast %108 : vector<8xf32> to vector<8x1xf32>
    %cst_45 = arith.constant 3.200000e+01 : f32
    %110 = vector.broadcast %cst_45 : f32 to vector<8x1xf32>
    %111 = arith.divf %109, %110 : vector<8x1xf32>
    %112 = vector.broadcast %104 : vector<8x1xf32> to vector<8x32xf32>
    %113 = arith.subf %96, %112 : vector<8x32xf32>
    %cst_46 = arith.constant 9.99999974E-6 : f32
    %114 = vector.broadcast %cst_46 : f32 to vector<8x1xf32>
    %115 = arith.addf %111, %114 : vector<8x1xf32>
    %116 = math.rsqrt %115 : vector<8x1xf32>
    %117 = vector.broadcast %116 : vector<8x1xf32> to vector<8x32xf32>
    %118 = arith.mulf %113, %117 : vector<8x32xf32>
    %119 = vector.broadcast %98 : vector<1x32xf32> to vector<8x32xf32>
    %120 = arith.mulf %118, %119 : vector<8x32xf32>
    %121 = vector.broadcast %100 : vector<1x32xf32> to vector<8x32xf32>
    %122 = arith.addf %120, %121 : vector<8x32xf32>
    %c0_47 = arith.constant 0 : index
    %c0_48 = arith.constant 0 : index
    %c0_49 = arith.constant 0 : index
    %123 = vector.load %arg9[%c0_47, %c0_48, %c0_49] : memref<1x32x64xbf16, #tpu.memory_space<vmem>>, vector<1x32x64xbf16>
    %124 = vector.shape_cast %123 : vector<1x32x64xbf16> to vector<32x64xbf16>
    %c0_50 = arith.constant 0 : index
    %c0_51 = arith.constant 0 : index
    %c0_52 = arith.constant 0 : index
    %125 = vector.load %arg11[%c0_50, %c0_51, %c0_52] : memref<1x64x32xbf16, #tpu.memory_space<vmem>>, vector<1x64x32xbf16>
    %126 = vector.shape_cast %125 : vector<1x64x32xbf16> to vector<64x32xbf16>
    %127 = arith.truncf %122 : vector<8x32xf32> to vector<8x32xbf16>
    %cst_53 = arith.constant dense<0.000000e+00> : vector<8x64xf32>
    %128 = tpu.matmul %127, %124, %cst_53 {dimension_numbers = #tpu.dot_dimension_numbers<[1], [0], [0], [1], [0, 0, 1, 1], [], []>} : vector<8x32xbf16>, vector<32x64xbf16>, vector<8x64xf32> -> vector<8x64xf32>
    %c0_54 = arith.constant 0 : index
    %c0_55 = arith.constant 0 : index
    %c0_56 = arith.constant 0 : index
    %129 = vector.load %arg10[%c0_54, %c0_55, %c0_56] : memref<1x1x64xf32, #tpu.memory_space<vmem>>, vector<1x1x64xf32>
    %130 = vector.shape_cast %129 : vector<1x1x64xf32> to vector<1x64xf32>
    %131 = vector.broadcast %130 : vector<1x64xf32> to vector<8x64xf32>
    %132 = arith.addf %128, %131 : vector<8x64xf32>
    %cst_57 = arith.constant 0.000000e+00 : f32
    %133 = vector.broadcast %cst_57 : f32 to vector<8x64xf32>
    %134 = arith.maximumf %132, %133 : vector<8x64xf32>
    %135 = arith.truncf %134 : vector<8x64xf32> to vector<8x64xbf16>
    %cst_58 = arith.constant dense<0.000000e+00> : vector<8x32xf32>
    %136 = tpu.matmul %135, %126, %cst_58 {dimension_numbers = #tpu.dot_dimension_numbers<[1], [0], [0], [1], [0, 0, 1, 1], [], []>} : vector<8x64xbf16>, vector<64x32xbf16>, vector<8x32xf32> -> vector<8x32xf32>
    %c0_59 = arith.constant 0 : index
    %c0_60 = arith.constant 0 : index
    %c0_61 = arith.constant 0 : index
    %137 = vector.load %arg12[%c0_59, %c0_60, %c0_61] : memref<1x1x32xf32, #tpu.memory_space<vmem>>, vector<1x1x32xf32>
    %138 = vector.shape_cast %137 : vector<1x1x32xf32> to vector<1x32xf32>
    %139 = vector.broadcast %138 : vector<1x32xf32> to vector<8x32xf32>
    %140 = arith.addf %136, %139 : vector<8x32xf32>
    %141 = arith.addf %122, %140 : vector<8x32xf32>
    %c0_62 = arith.constant 0 : index
    %c0_63 = arith.constant 0 : index
    %c0_64 = arith.constant 0 : index
    %142 = vector.load %arg13[%c0_62, %c0_63, %c0_64] : memref<1x1x32xf32, #tpu.memory_space<vmem>>, vector<1x1x32xf32>
    %143 = vector.shape_cast %142 : vector<1x1x32xf32> to vector<1x32xf32>
    %c0_65 = arith.constant 0 : index
    %c0_66 = arith.constant 0 : index
    %c0_67 = arith.constant 0 : index
    %144 = vector.load %arg14[%c0_65, %c0_66, %c0_67] : memref<1x1x32xf32, #tpu.memory_space<vmem>>, vector<1x1x32xf32>
    %145 = vector.shape_cast %144 : vector<1x1x32xf32> to vector<1x32xf32>
    %cst_68 = arith.constant dense<0.000000e+00> : vector<8xf32>
    %146 = vector.multi_reduction <add>, %141, %cst_68 [1] : vector<8x32xf32> to vector<8xf32>
    %147 = vector.shape_cast %146 : vector<8xf32> to vector<8x1xf32>
    %cst_69 = arith.constant 3.200000e+01 : f32
    %148 = vector.broadcast %cst_69 : f32 to vector<8x1xf32>
    %149 = arith.divf %147, %148 : vector<8x1xf32>
    %150 = vector.broadcast %149 : vector<8x1xf32> to vector<8x32xf32>
    %151 = arith.subf %141, %150 : vector<8x32xf32>
    %152 = arith.mulf %151, %151 : vector<8x32xf32>
    %cst_70 = arith.constant dense<0.000000e+00> : vector<8xf32>
    %153 = vector.multi_reduction <add>, %152, %cst_70 [1] : vector<8x32xf32> to vector<8xf32>
    %154 = vector.shape_cast %153 : vector<8xf32> to vector<8x1xf32>
    %cst_71 = arith.constant 3.200000e+01 : f32
    %155 = vector.broadcast %cst_71 : f32 to vector<8x1xf32>
    %156 = arith.divf %154, %155 : vector<8x1xf32>
    %157 = vector.broadcast %149 : vector<8x1xf32> to vector<8x32xf32>
    %158 = arith.subf %141, %157 : vector<8x32xf32>
    %cst_72 = arith.constant 9.99999974E-6 : f32
    %159 = vector.broadcast %cst_72 : f32 to vector<8x1xf32>
    %160 = arith.addf %156, %159 : vector<8x1xf32>
    %161 = math.rsqrt %160 : vector<8x1xf32>
    %162 = vector.broadcast %161 : vector<8x1xf32> to vector<8x32xf32>
    %163 = arith.mulf %158, %162 : vector<8x32xf32>
    %164 = vector.broadcast %143 : vector<1x32xf32> to vector<8x32xf32>
    %165 = arith.mulf %163, %164 : vector<8x32xf32>
    %166 = vector.broadcast %145 : vector<1x32xf32> to vector<8x32xf32>
    %167 = arith.addf %165, %166 : vector<8x32xf32>
    %c0_73 = arith.constant 0 : index
    %c0_74 = arith.constant 0 : index
    %168 = vector.load %arg18[%c0_73, %c0_74] : memref<8x32xf32, #tpu.memory_space<vmem>>, vector<8x32xf32>
    tpu.vector_store %arg18[%c0_73, %c0_74], %167 {strides = array<i32>} : memref<8x32xf32, #tpu.memory_space<vmem>>, vector<8x32xf32>,
    %c1_i32 = arith.constant 1 : i32
    %169 = arith.cmpi eq, %arg1, %c1_i32 : i32
    %170 = arith.extui %169 : i1 to i32
    %c0_i32_75 = arith.constant 0 : i32
    %171 = arith.cmpi ne, %170, %c0_i32_75 : i32
    scf.if %171 {
      %c0_76 = arith.constant 0 : index
      %c0_77 = arith.constant 0 : index
      %172 = vector.load %arg15[%c0_76, %c0_77] : memref<32x1xf32, #tpu.memory_space<vmem>>, vector<32x1xf32>
      %cst_78 = arith.constant dense<0.000000e+00> : vector<8x1xf32>
      %173 = tpu.matmul %167, %172, %cst_78 {dimension_numbers = #tpu.dot_dimension_numbers<[1], [0], [0], [1], [0, 0, 1, 1], [], []>} : vector<8x32xf32>, vector<32x1xf32>, vector<8x1xf32> -> vector<8x1xf32>
      %cst_79 = arith.constant dense<0.000000e+00> : vector<1xf32>
      %174 = vector.multi_reduction <add>, %173, %cst_79 [0] : vector<8x1xf32> to vector<1xf32>
      %175 = vector.shape_cast %174 : vector<1xf32> to vector<1x1xf32>
      %cst_80 = arith.constant 1.250000e-01 : f32
      %176 = vector.broadcast %cst_80 : f32 to vector<1x1xf32>
      %177 = arith.mulf %175, %176 : vector<1x1xf32>
      %c0_81 = arith.constant 0 : index
      %c0_82 = arith.constant 0 : index
      %178 = vector.load %arg16[%c0_81, %c0_82] : memref<1x1xf32, #tpu.memory_space<vmem>>, vector<1x1xf32>
      %179 = arith.addf %177, %178 : vector<1x1xf32>
      %cst_83 = arith.constant 0.000000e+00 : f32
      %180 = vector.broadcast %cst_83 : f32 to vector<1x1xf32>
      %181 = arith.subf %180, %179 : vector<1x1xf32>
      %182 = math.exp %181 : vector<1x1xf32>
      %cst_84 = arith.constant 1.000000e+00 : f32
      %183 = vector.broadcast %cst_84 : f32 to vector<1x1xf32>
      %184 = arith.addf %183, %182 : vector<1x1xf32>
      %cst_85 = arith.constant 1.000000e+00 : f32
      %185 = vector.broadcast %cst_85 : f32 to vector<1x1xf32>
      %186 = arith.divf %185, %184 : vector<1x1xf32>
      %c0_86 = arith.constant 0 : index
      %c0_87 = arith.constant 0 : index
      %c0_88 = arith.constant 0 : index
      %187 = vector.load %arg17[%c0_86, %c0_87, %c0_88] : memref<1x1x1xf32, #tpu.memory_space<vmem>>, vector<1x1x1xf32>
      %188 = vector.shape_cast %187 : vector<1x1x1xf32> to vector<1x1xf32>
      %189 = vector.shape_cast %186 : vector<1x1xf32> to vector<1x1x1xf32>
      tpu.vector_store %arg17[%c0_86, %c0_87, %c0_88], %189 {strides = array<i32>} : memref<1x1x1xf32, #tpu.memory_space<vmem>>, vector<1x1x1xf32>,
    } else {
    }
    return
  }
  func.func @transform_0(%arg0: i32, %arg1: i32) -> (i32, i32, i32) {
    %c0_i32 = arith.constant 0 : i32
    %c0_i32_0 = arith.constant 0 : i32
    %c0_i32_1 = arith.constant 0 : i32
    return %arg0, %c0_i32, %c0_i32_0 : i32, i32, i32
  }
  func.func @transform_1(%arg0: i32, %arg1: i32) -> (i32, i32, i32) {
    %c0_i32 = arith.constant 0 : i32
    %c0_i32_0 = arith.constant 0 : i32
    %c0_i32_1 = arith.constant 0 : i32
    return %arg1, %c0_i32, %c0_i32_0 : i32, i32, i32
  }
  func.func @transform_2(%arg0: i32, %arg1: i32) -> (i32, i32, i32) {
    %c0_i32 = arith.constant 0 : i32
    %c0_i32_0 = arith.constant 0 : i32
    %c0_i32_1 = arith.constant 0 : i32
    return %arg1, %c0_i32, %c0_i32_0 : i32, i32, i32
  }
  func.func @transform_3(%arg0: i32, %arg1: i32) -> (i32, i32, i32) {
    %c0_i32 = arith.constant 0 : i32
    %c0_i32_0 = arith.constant 0 : i32
    %c0_i32_1 = arith.constant 0 : i32
    return %arg1, %c0_i32, %c0_i32_0 : i32, i32, i32
  }
  func.func @transform_4(%arg0: i32, %arg1: i32) -> (i32, i32, i32) {
    %c0_i32 = arith.constant 0 : i32
    %c0_i32_0 = arith.constant 0 : i32
    %c0_i32_1 = arith.constant 0 : i32
    return %arg1, %c0_i32, %c0_i32_0 : i32, i32, i32
  }
  func.func @transform_5(%arg0: i32, %arg1: i32) -> (i32, i32, i32) {
    %c0_i32 = arith.constant 0 : i32
    %c0_i32_0 = arith.constant 0 : i32
    %c0_i32_1 = arith.constant 0 : i32
    return %arg1, %c0_i32, %c0_i32_0 : i32, i32, i32
  }
  func.func @transform_6(%arg0: i32, %arg1: i32) -> (i32, i32, i32) {
    %c0_i32 = arith.constant 0 : i32
    %c0_i32_0 = arith.constant 0 : i32
    %c0_i32_1 = arith.constant 0 : i32
    return %arg1, %c0_i32, %c0_i32_0 : i32, i32, i32
  }
  func.func @transform_7(%arg0: i32, %arg1: i32) -> (i32, i32, i32) {
    %c0_i32 = arith.constant 0 : i32
    %c0_i32_0 = arith.constant 0 : i32
    %c0_i32_1 = arith.constant 0 : i32
    return %arg1, %c0_i32, %c0_i32_0 : i32, i32, i32
  }
  func.func @transform_8(%arg0: i32, %arg1: i32) -> (i32, i32, i32) {
    %c0_i32 = arith.constant 0 : i32
    %c0_i32_0 = arith.constant 0 : i32
    %c0_i32_1 = arith.constant 0 : i32
    return %arg1, %c0_i32, %c0_i32_0 : i32, i32, i32
  }
  func.func @transform_9(%arg0: i32, %arg1: i32) -> (i32, i32, i32) {
    %c0_i32 = arith.constant 0 : i32
    %c0_i32_0 = arith.constant 0 : i32
    %c0_i32_1 = arith.constant 0 : i32
    return %arg1, %c0_i32, %c0_i32_0 : i32, i32, i32
  }
  func.func @transform_10(%arg0: i32, %arg1: i32) -> (i32, i32, i32) {
    %c0_i32 = arith.constant 0 : i32
    %c0_i32_0 = arith.constant 0 : i32
    %c0_i32_1 = arith.constant 0 : i32
    return %arg1, %c0_i32, %c0_i32_0 : i32, i32, i32
  }
  func.func @transform_11(%arg0: i32, %arg1: i32) -> (i32, i32, i32) {
    %c0_i32 = arith.constant 0 : i32
    %c0_i32_0 = arith.constant 0 : i32
    %c0_i32_1 = arith.constant 0 : i32
    return %arg1, %c0_i32, %c0_i32_0 : i32, i32, i32
  }
  func.func @transform_12(%arg0: i32, %arg1: i32) -> (i32, i32, i32) {
    %c0_i32 = arith.constant 0 : i32
    %c0_i32_0 = arith.constant 0 : i32
    %c0_i32_1 = arith.constant 0 : i32
    return %arg1, %c0_i32, %c0_i32_0 : i32, i32, i32
  }
  func.func @transform_13(%arg0: i32, %arg1: i32) -> (i32, i32) {
    %c0_i32 = arith.constant 0 : i32
    %c0_i32_0 = arith.constant 0 : i32
    %c0_i32_1 = arith.constant 0 : i32
    return %c0_i32, %c0_i32_0 : i32, i32
  }
  func.func @transform_14(%arg0: i32, %arg1: i32) -> (i32, i32) {
    %c0_i32 = arith.constant 0 : i32
    %c0_i32_0 = arith.constant 0 : i32
    %c0_i32_1 = arith.constant 0 : i32
    return %c0_i32, %c0_i32_0 : i32, i32
  }
  func.func @transform_15(%arg0: i32, %arg1: i32) -> (i32, i32, i32) {
    %c0_i32 = arith.constant 0 : i32
    %c0_i32_0 = arith.constant 0 : i32
    %c0_i32_1 = arith.constant 0 : i32
    return %arg0, %c0_i32, %c0_i32_0 : i32, i32, i32
  }
}

</mosaic_0001>

<llo_original>
// kernel: forward.1
$region0: #{forward.1}
  #allocation0 [shape = 'u32[]', space=smem, size = 0x4, offset = 0x4, fixed_abs, tag = 'smem constant byte address 0x4 - core index']
  #allocation1 [shape = 'u32[144,128]{1,0:T(1,128)}', space=vmem, size = 0x12000, scoped, tag = 'internal scratch']
  #allocation2 [shape = 'f32[8,32]{1,0:T(8,128)}', space=vmem, size = 0x1000, scoped, tag = 'scratch operand']
  #allocation3 [shape = 'f32[1,1]{1,0:T(1,128)S(1)}', space=vmem, size = 0x200, scoped, tag = 'scoped memory for forward.1']
  %s0 = inlined_call_operand.vmem [shape: f32[2,8,32], index: 0, kind: input, shape index: {}]
  %s1 = inlined_call_operand.vmem [shape: bf16[2,32,96], index: 1, kind: input, shape index: {}]
  %s2 = inlined_call_operand.vmem [shape: f32[2,1,96], index: 2, kind: input, shape index: {}]
  %s3 = inlined_call_operand.vmem [shape: bf16[2,32,32], index: 3, kind: input, shape index: {}]
  %s4 = inlined_call_operand.vmem [shape: f32[2,1,32], index: 4, kind: input, shape index: {}]
  %s5 = inlined_call_operand.vmem [shape: f32[2,1,32], index: 5, kind: input, shape index: {}]
  %s6 = inlined_call_operand.vmem [shape: f32[2,1,32], index: 6, kind: input, shape index: {}]
  %s7 = inlined_call_operand.vmem [shape: bf16[2,32,64], index: 7, kind: input, shape index: {}]
  %s8 = inlined_call_operand.vmem [shape: f32[2,1,64], index: 8, kind: input, shape index: {}]
  %s9 = inlined_call_operand.vmem [shape: bf16[2,64,32], index: 9, kind: input, shape index: {}]
  %s10 = inlined_call_operand.vmem [shape: f32[2,1,32], index: 10, kind: input, shape index: {}]
  %s11 = inlined_call_operand.vmem [shape: f32[2,1,32], index: 11, kind: input, shape index: {}]
  %s12 = inlined_call_operand.vmem [shape: f32[2,1,32], index: 12, kind: input, shape index: {}]
  %s13 = inlined_call_operand.vmem [shape: f32[32,1], index: 13, kind: input, shape index: {}]
  %s14 = inlined_call_operand.<no memory space> [shape: f32[1,1], index: 14, kind: input, shape index: {}]
  %s15 = inlined_call_operand.vmem [shape: f32[2,1,1], index: 15, kind: output, shape index: {}]
  %s16 = sld [smem:[#allocation0]]
  $region101: #{forward.1} parent=0
    _
  %s18 = ssub.s32 1, %s16
  %s19 = scalar_select 0, %s18, %s16
  %v20 = vstv %s14
  %21 = vst [vmem:[#allocation3] sm:$0x1] %v20
  loop: start=0, step=1, limit=6
  $region2: #{forward.1} parent=0 // loop_pre_header
    _
  $region3: #{forward.1} parent=0 // loop_header
    %s23 = sphi 0, %s27
    %p24 = scmp.ge.s32.totalorder %s23, 6
    %s30 = sphi 0, %s42
    %s31 = sphi 0, %s38
    %s32 = sphi 0, %s30
    %s33 = sphi 0, %s31
    %s34 = sphi 0, %s32
    %s35 = sphi 0, %s33
    %s45 = sphi 0, %s47
    %s48 = sphi 0, %s45
    %s49 = sphi 0, %s48
    %s65 = sphi 0, %s49
    %s71 = sphi 0, %s73
    %s74 = sphi 0, %s71
    %s75 = sphi 0, %s74
    %s91 = sphi 0, %s75
    %s97 = sphi 0, %s99
    %s100 = sphi 0, %s97
    %s101 = sphi 0, %s100
    %s117 = sphi 0, %s101
    %s123 = sphi 0, %s125
    %s126 = sphi 0, %s123
    %s127 = sphi 0, %s126
    %s143 = sphi 0, %s127
    %s149 = sphi 0, %s151
    %s152 = sphi 0, %s149
    %s153 = sphi 0, %s152
    %s169 = sphi 0, %s153
    %s175 = sphi 0, %s177
    %s178 = sphi 0, %s175
    %s179 = sphi 0, %s178
    %s195 = sphi 0, %s179
    %s201 = sphi 0, %s203
    %s204 = sphi 0, %s201
    %s205 = sphi 0, %s204
    %s221 = sphi 0, %s205
    %s227 = sphi 0, %s229
    %s230 = sphi 0, %s227
    %s231 = sphi 0, %s230
    %s247 = sphi 0, %s231
    %s253 = sphi 0, %s255
    %s256 = sphi 0, %s253
    %s257 = sphi 0, %s256
    %s273 = sphi 0, %s257
    %s279 = sphi 0, %s281
    %s282 = sphi 0, %s279
    %s283 = sphi 0, %s282
    %s299 = sphi 0, %s283
    %s305 = sphi 0, %s307
    %s308 = sphi 0, %s305
    %s309 = sphi 0, %s308
    %s325 = sphi 0, %s309
    %s331 = sphi 0, %s333
    %s334 = sphi 0, %s331
    %s335 = sphi 0, %s334
    %s351 = sphi 0, %s335
    %s357 = sphi 0, %s359
    %s360 = sphi 0, %s357
    %s361 = sphi 0, %s360
    %s377 = sphi 0, %s361
    %s381 = sphi 0, %s381
    %s383 = sphi 0, %s381
    %s384 = sphi 0, %s383
    %s398 = sphi 0, %s384
    %s402 = sphi 0, %s402
    %s404 = sphi 0, %s402
    %s405 = sphi 0, %s404
    %s419 = sphi 0, %s405
    %s425 = sphi 0, %s427
    %s428 = sphi 0, %s425
    %s429 = sphi 0, %s428
    %s445 = sphi 0, %s429
  $region4: #{forward.1} parent=0 // loop_header_branch
    %26 = sbr.rel (%p24) target = $region8
  $region5: #{forward.1} parent=0 // loop_body
    %s28 = ssub.s32 %s23, 1
    %s29 = ssub.s32 %s23, 2
    %s36 = sadd.s32 1, %s31
    %p37 = scmp.ge.s32.totalorder %s36, 2
    %s38 = scalar_select %p37, 0, %s36
    %s39 = sadd.s32 1, %s30
    %s40 = scalar_select %p37, %s39, %s30
    %p41 = scmp.ge.s32.totalorder %s40, 2
    %s42 = scalar_select %p41, 0, %s40
    %s43 = ssub.s32 %s30, %s42
    %p44 = scmp.eq.s32.totalorder %s43, 0
    %s46 = sadd.s32 %s45, 1
    %s47 = scalar_select %p44, %s45, %s46
    %p50 = pneg %p44
    %p51 = scmp.eq.s32.totalorder %s23, 3
    %p52 = por %p50, %p51
    %p53 = scmp.ne.s32.totalorder %s45, %s48
    %p54 = scmp.eq.s32.totalorder %s23, 0
    %p55 = por %p53, %p54
    %p56 = scmp.ne.s32.totalorder %s45, %s48
    %p57 = scmp.eq.s32.totalorder %s28, 3
    %p58 = por %p56, %p57
    %p59 = scmp.ne.s32.totalorder %s48, %s49
    %p60 = scmp.eq.s32.totalorder %s28, 0
    %p61 = por %p59, %p60
    %p62 = scmp.ne.s32.totalorder %s48, %s49
    %p63 = scmp.eq.s32.totalorder %s29, 3
    %p64 = por %p62, %p63
    %p66 = scmp.ne.s32.totalorder %s49, %s65
    %p67 = scmp.eq.s32.totalorder %s29, 0
    %p68 = por %p66, %p67
    %s69 = ssub.s32 %s31, %s38
    %p70 = scmp.eq.s32.totalorder %s69, 0
    %s72 = sadd.s32 %s71, 1
    %s73 = scalar_select %p70, %s71, %s72
    %p76 = pneg %p70
    %p77 = scmp.eq.s32.totalorder %s23, 3
    %p78 = por %p76, %p77
    %p79 = scmp.ne.s32.totalorder %s71, %s74
    %p80 = scmp.eq.s32.totalorder %s23, 0
    %p81 = por %p79, %p80
    %p82 = scmp.ne.s32.totalorder %s71, %s74
    %p83 = scmp.eq.s32.totalorder %s28, 3
    %p84 = por %p82, %p83
    %p85 = scmp.ne.s32.totalorder %s74, %s75
    %p86 = scmp.eq.s32.totalorder %s28, 0
    %p87 = por %p85, %p86
    %p88 = scmp.ne.s32.totalorder %s74, %s75
    %p89 = scmp.eq.s32.totalorder %s29, 3
    %p90 = por %p88, %p89
    %p92 = scmp.ne.s32.totalorder %s75, %s91
    %p93 = scmp.eq.s32.totalorder %s29, 0
    %p94 = por %p92, %p93
    %s95 = ssub.s32 %s31, %s38
    %p96 = scmp.eq.s32.totalorder %s95, 0
    %s98 = sadd.s32 %s97, 1
    %s99 = scalar_select %p96, %s97, %s98
    %p102 = pneg %p96
    %p103 = scmp.eq.s32.totalorder %s23, 3
    %p104 = por %p102, %p103
    %p105 = scmp.ne.s32.totalorder %s97, %s100
    %p106 = scmp.eq.s32.totalorder %s23, 0
    %p107 = por %p105, %p106
    %p108 = scmp.ne.s32.totalorder %s97, %s100
    %p109 = scmp.eq.s32.totalorder %s28, 3
    %p110 = por %p108, %p109
    %p111 = scmp.ne.s32.totalorder %s100, %s101
    %p112 = scmp.eq.s32.totalorder %s28, 0
    %p113 = por %p111, %p112
    %p114 = scmp.ne.s32.totalorder %s100, %s101
    %p115 = scmp.eq.s32.totalorder %s29, 3
    %p116 = por %p114, %p115
    %p118 = scmp.ne.s32.totalorder %s101, %s117
    %p119 = scmp.eq.s32.totalorder %s29, 0
    %p120 = por %p118, %p119
    %s121 = ssub.s32 %s31, %s38
    %p122 = scmp.eq.s32.totalorder %s121, 0
    %s124 = sadd.s32 %s123, 1
    %s125 = scalar_select %p122, %s123, %s124
    %p128 = pneg %p122
    %p129 = scmp.eq.s32.totalorder %s23, 3
    %p130 = por %p128, %p129
    %p131 = scmp.ne.s32.totalorder %s123, %s126
    %p132 = scmp.eq.s32.totalorder %s23, 0
    %p133 = por %p131, %p132
    %p134 = scmp.ne.s32.totalorder %s123, %s126
    %p135 = scmp.eq.s32.totalorder %s28, 3
    %p136 = por %p134, %p135
    %p137 = scmp.ne.s32.totalorder %s126, %s127
    %p138 = scmp.eq.s32.totalorder %s28, 0
    %p139 = por %p137, %p138
    %p140 = scmp.ne.s32.totalorder %s126, %s127
    %p141 = scmp.eq.s32.totalorder %s29, 3
    %p142 = por %p140, %p141
    %p144 = scmp.ne.s32.totalorder %s127, %s143
    %p145 = scmp.eq.s32.totalorder %s29, 0
    %p146 = por %p144, %p145
    %s147 = ssub.s32 %s31, %s38
    %p148 = scmp.eq.s32.totalorder %s147, 0
    %s150 = sadd.s32 %s149, 1
    %s151 = scalar_select %p148, %s149, %s150
    %p154 = pneg %p148
    %p155 = scmp.eq.s32.totalorder %s23, 3
    %p156 = por %p154, %p155
    %p157 = scmp.ne.s32.totalorder %s149, %s152
    %p158 = scmp.eq.s32.totalorder %s23, 0
    %p159 = por %p157, %p158
    %p160 = scmp.ne.s32.totalorder %s149, %s152
    %p161 = scmp.eq.s32.totalorder %s28, 3
    %p162 = por %p160, %p161
    %p163 = scmp.ne.s32.totalorder %s152, %s153
    %p164 = scmp.eq.s32.totalorder %s28, 0
    %p165 = por %p163, %p164
    %p166 = scmp.ne.s32.totalorder %s152, %s153
    %p167 = scmp.eq.s32.totalorder %s29, 3
    %p168 = por %p166, %p167
    %p170 = scmp.ne.s32.totalorder %s153, %s169
    %p171 = scmp.eq.s32.totalorder %s29, 0
    %p172 = por %p170, %p171
    %s173 = ssub.s32 %s31, %s38
    %p174 = scmp.eq.s32.totalorder %s173, 0
    %s176 = sadd.s32 %s175, 1
    %s177 = scalar_select %p174, %s175, %s176
    %p180 = pneg %p174
    %p181 = scmp.eq.s32.totalorder %s23, 3
    %p182 = por %p180, %p181
    %p183 = scmp.ne.s32.totalorder %s175, %s178
    %p184 = scmp.eq.s32.totalorder %s23, 0
    %p185 = por %p183, %p184
    %p186 = scmp.ne.s32.totalorder %s175, %s178
    %p187 = scmp.eq.s32.totalorder %s28, 3
    %p188 = por %p186, %p187
    %p189 = scmp.ne.s32.totalorder %s178, %s179
    %p190 = scmp.eq.s32.totalorder %s28, 0
    %p191 = por %p189, %p190
    %p192 = scmp.ne.s32.totalorder %s178, %s179
    %p193 = scmp.eq.s32.totalorder %s29, 3
    %p194 = por %p192, %p193
    %p196 = scmp.ne.s32.totalorder %s179, %s195
    %p197 = scmp.eq.s32.totalorder %s29, 0
    %p198 = por %p196, %p197
    %s199 = ssub.s32 %s31, %s38
    %p200 = scmp.eq.s32.totalorder %s199, 0
    %s202 = sadd.s32 %s201, 1
    %s203 = scalar_select %p200, %s201, %s202
    %p206 = pneg %p200
    %p207 = scmp.eq.s32.totalorder %s23, 3
    %p208 = por %p206, %p207
    %p209 = scmp.ne.s32.totalorder %s201, %s204
    %p210 = scmp.eq.s32.totalorder %s23, 0
    %p211 = por %p209, %p210
    %p212 = scmp.ne.s32.totalorder %s201, %s204
    %p213 = scmp.eq.s32.totalorder %s28, 3
    %p214 = por %p212, %p213
    %p215 = scmp.ne.s32.totalorder %s204, %s205
    %p216 = scmp.eq.s32.totalorder %s28, 0
    %p217 = por %p215, %p216
    %p218 = scmp.ne.s32.totalorder %s204, %s205
    %p219 = scmp.eq.s32.totalorder %s29, 3
    %p220 = por %p218, %p219
    %p222 = scmp.ne.s32.totalorder %s205, %s221
    %p223 = scmp.eq.s32.totalorder %s29, 0
    %p224 = por %p222, %p223
    %s225 = ssub.s32 %s31, %s38
    %p226 = scmp.eq.s32.totalorder %s225, 0
    %s228 = sadd.s32 %s227, 1
    %s229 = scalar_select %p226, %s227, %s228
    %p232 = pneg %p226
    %p233 = scmp.eq.s32.totalorder %s23, 3
    %p234 = por %p232, %p233
    %p235 = scmp.ne.s32.totalorder %s227, %s230
    %p236 = scmp.eq.s32.totalorder %s23, 0
    %p237 = por %p235, %p236
    %p238 = scmp.ne.s32.totalorder %s227, %s230
    %p239 = scmp.eq.s32.totalorder %s28, 3
    %p240 = por %p238, %p239
    %p241 = scmp.ne.s32.totalorder %s230, %s231
    %p242 = scmp.eq.s32.totalorder %s28, 0
    %p243 = por %p241, %p242
    %p244 = scmp.ne.s32.totalorder %s230, %s231
    %p245 = scmp.eq.s32.totalorder %s29, 3
    %p246 = por %p244, %p245
    %p248 = scmp.ne.s32.totalorder %s231, %s247
    %p249 = scmp.eq.s32.totalorder %s29, 0
    %p250 = por %p248, %p249
    %s251 = ssub.s32 %s31, %s38
    %p252 = scmp.eq.s32.totalorder %s251, 0
    %s254 = sadd.s32 %s253, 1
    %s255 = scalar_select %p252, %s253, %s254
    %p258 = pneg %p252
    %p259 = scmp.eq.s32.totalorder %s23, 3
    %p260 = por %p258, %p259
    %p261 = scmp.ne.s32.totalorder %s253, %s256
    %p262 = scmp.eq.s32.totalorder %s23, 0
    %p263 = por %p261, %p262
    %p264 = scmp.ne.s32.totalorder %s253, %s256
    %p265 = scmp.eq.s32.totalorder %s28, 3
    %p266 = por %p264, %p265
    %p267 = scmp.ne.s32.totalorder %s256, %s257
    %p268 = scmp.eq.s32.totalorder %s28, 0
    %p269 = por %p267, %p268
    %p270 = scmp.ne.s32.totalorder %s256, %s257
    %p271 = scmp.eq.s32.totalorder %s29, 3
    %p272 = por %p270, %p271
    %p274 = scmp.ne.s32.totalorder %s257, %s273
    %p275 = scmp.eq.s32.totalorder %s29, 0
    %p276 = por %p274, %p275
    %s277 = ssub.s32 %s31, %s38
    %p278 = scmp.eq.s32.totalorder %s277, 0
    %s280 = sadd.s32 %s279, 1
    %s281 = scalar_select %p278, %s279, %s280
    %p284 = pneg %p278
    %p285 = scmp.eq.s32.totalorder %s23, 3
    %p286 = por %p284, %p285
    %p287 = scmp.ne.s32.totalorder %s279, %s282
    %p288 = scmp.eq.s32.totalorder %s23, 0
    %p289 = por %p287, %p288
    %p290 = scmp.ne.s32.totalorder %s279, %s282
    %p291 = scmp.eq.s32.totalorder %s28, 3
    %p292 = por %p290, %p291
    %p293 = scmp.ne.s32.totalorder %s282, %s283
    %p294 = scmp.eq.s32.totalorder %s28, 0
    %p295 = por %p293, %p294
    %p296 = scmp.ne.s32.totalorder %s282, %s283
    %p297 = scmp.eq.s32.totalorder %s29, 3
    %p298 = por %p296, %p297
    %p300 = scmp.ne.s32.totalorder %s283, %s299
    %p301 = scmp.eq.s32.totalorder %s29, 0
    %p302 = por %p300, %p301
    %s303 = ssub.s32 %s31, %s38
    %p304 = scmp.eq.s32.totalorder %s303, 0
    %s306 = sadd.s32 %s305, 1
    %s307 = scalar_select %p304, %s305, %s306
    %p310 = pneg %p304
    %p311 = scmp.eq.s32.totalorder %s23, 3
    %p312 = por %p310, %p311
    %p313 = scmp.ne.s32.totalorder %s305, %s308
    %p314 = scmp.eq.s32.totalorder %s23, 0
    %p315 = por %p313, %p314
    %p316 = scmp.ne.s32.totalorder %s305, %s308
    %p317 = scmp.eq.s32.totalorder %s28, 3
    %p318 = por %p316, %p317
    %p319 = scmp.ne.s32.totalorder %s308, %s309
    %p320 = scmp.eq.s32.totalorder %s28, 0
    %p321 = por %p319, %p320
    %p322 = scmp.ne.s32.totalorder %s308, %s309
    %p323 = scmp.eq.s32.totalorder %s29, 3
    %p324 = por %p322, %p323
    %p326 = scmp.ne.s32.totalorder %s309, %s325
    %p327 = scmp.eq.s32.totalorder %s29, 0
    %p328 = por %p326, %p327
    %s329 = ssub.s32 %s31, %s38
    %p330 = scmp.eq.s32.totalorder %s329, 0
    %s332 = sadd.s32 %s331, 1
    %s333 = scalar_select %p330, %s331, %s332
    %p336 = pneg %p330
    %p337 = scmp.eq.s32.totalorder %s23, 3
    %p338 = por %p336, %p337
    %p339 = scmp.ne.s32.totalorder %s331, %s334
    %p340 = scmp.eq.s32.totalorder %s23, 0
    %p341 = por %p339, %p340
    %p342 = scmp.ne.s32.totalorder %s331, %s334
    %p343 = scmp.eq.s32.totalorder %s28, 3
    %p344 = por %p342, %p343
    %p345 = scmp.ne.s32.totalorder %s334, %s335
    %p346 = scmp.eq.s32.totalorder %s28, 0
    %p347 = por %p345, %p346
    %p348 = scmp.ne.s32.totalorder %s334, %s335
    %p349 = scmp.eq.s32.totalorder %s29, 3
    %p350 = por %p348, %p349
    %p352 = scmp.ne.s32.totalorder %s335, %s351
    %p353 = scmp.eq.s32.totalorder %s29, 0
    %p354 = por %p352, %p353
    %s355 = ssub.s32 %s31, %s38
    %p356 = scmp.eq.s32.totalorder %s355, 0
    %s358 = sadd.s32 %s357, 1
    %s359 = scalar_select %p356, %s357, %s358
    %p362 = pneg %p356
    %p363 = scmp.eq.s32.totalorder %s23, 3
    %p364 = por %p362, %p363
    %p365 = scmp.ne.s32.totalorder %s357, %s360
    %p366 = scmp.eq.s32.totalorder %s23, 0
    %p367 = por %p365, %p366
    %p368 = scmp.ne.s32.totalorder %s357, %s360
    %p369 = scmp.eq.s32.totalorder %s28, 3
    %p370 = por %p368, %p369
    %p371 = scmp.ne.s32.totalorder %s360, %s361
    %p372 = scmp.eq.s32.totalorder %s28, 0
    %p373 = por %p371, %p372
    %p374 = scmp.ne.s32.totalorder %s360, %s361
    %p375 = scmp.eq.s32.totalorder %s29, 3
    %p376 = por %p374, %p375
    %p378 = scmp.ne.s32.totalorder %s361, %s377
    %p379 = scmp.eq.s32.totalorder %s29, 0
    %p380 = por %p378, %p379
    %s382 = sadd.s32 %s381, 1
    %p385 = scmp.eq.s32.totalorder %s23, 3
    %p386 = scmp.ne.s32.totalorder %s381, %s383
    %p387 = scmp.eq.s32.totalorder %s23, 0
    %p388 = por %p386, %p387
    %p389 = scmp.ne.s32.totalorder %s381, %s383
    %p390 = scmp.eq.s32.totalorder %s28, 3
    %p391 = por %p389, %p390
    %p392 = scmp.ne.s32.totalorder %s383, %s384
    %p393 = scmp.eq.s32.totalorder %s28, 0
    %p394 = por %p392, %p393
    %p395 = scmp.ne.s32.totalorder %s383, %s384
    %p396 = scmp.eq.s32.totalorder %s29, 3
    %p397 = por %p395, %p396
    %p399 = scmp.ne.s32.totalorder %s384, %s398
    %p400 = scmp.eq.s32.totalorder %s29, 0
    %p401 = por %p399, %p400
    %s403 = sadd.s32 %s402, 1
    %p406 = scmp.eq.s32.totalorder %s23, 3
    %p407 = scmp.ne.s32.totalorder %s402, %s404
    %p408 = scmp.eq.s32.totalorder %s23, 0
    %p409 = por %p407, %p408
    %p410 = scmp.ne.s32.totalorder %s402, %s404
    %p411 = scmp.eq.s32.totalorder %s28, 3
    %p412 = por %p410, %p411
    %p413 = scmp.ne.s32.totalorder %s404, %s405
    %p414 = scmp.eq.s32.totalorder %s28, 0
    %p415 = por %p413, %p414
    %p416 = scmp.ne.s32.totalorder %s404, %s405
    %p417 = scmp.eq.s32.totalorder %s29, 3
    %p418 = por %p416, %p417
    %p420 = scmp.ne.s32.totalorder %s405, %s419
    %p421 = scmp.eq.s32.totalorder %s29, 0
    %p422 = por %p420, %p421
    %s423 = ssub.s32 %s30, %s42
    %p424 = scmp.eq.s32.totalorder %s423, 0
    %s426 = sadd.s32 %s425, 1
    %s427 = scalar_select %p424, %s425, %s426
    %p430 = pneg %p424
    %p431 = scmp.eq.s32.totalorder %s23, 3
    %p432 = por %p430, %p431
    %p433 = scmp.ne.s32.totalorder %s425, %s428
    %p434 = scmp.eq.s32.totalorder %s23, 0
    %p435 = por %p433, %p434
    %p436 = scmp.ne.s32.totalorder %s425, %s428
    %p437 = scmp.eq.s32.totalorder %s28, 3
    %p438 = por %p436, %p437
    %p439 = scmp.ne.s32.totalorder %s428, %s429
    %p440 = scmp.eq.s32.totalorder %s28, 0
    %p441 = por %p439, %p440
    %p442 = scmp.ne.s32.totalorder %s428, %s429
    %p443 = scmp.eq.s32.totalorder %s29, 3
    %p444 = por %p442, %p443
    %p446 = scmp.ne.s32.totalorder %s429, %s445
    %p447 = scmp.eq.s32.totalorder %s29, 0
    %p448 = por %p446, %p447
    %p449 = scmp.le.s32.totalorder 1, %s23
    %p450 = scmp.lt.s32.totalorder %s23, 5
    %p451 = pnand %p449, %p450
    %p452 = pneg %p451
    // Predicated region
    $region9: #{forward.1} parent=5 // pred_check
      _
    $region10: #{forward.1} parent=5 // pred_check_branch
      %454 = sbr.rel (%p451) target = $region12
    $region11: #{forward.1} parent=5 // pred_region
      %s455 = ssub.s32 %s23, 1
      // Predicated region
      $region13: #{forward.1} parent=11 // pred_check
        %p456 = pneg %p394
      $region14: #{forward.1} parent=11 // pred_check_branch
        %458 = sbr.rel (%p456) target = $region16
      $region15: #{forward.1} parent=11 // pred_region
        _
      $region16: #{forward.1} parent=11 // pred_fallthru
        _
      // Predicated region
      $region17: #{forward.1} parent=11 // pred_check
        %p459 = pneg %p415
      $region18: #{forward.1} parent=11 // pred_check_branch
        %461 = sbr.rel (%p459) target = $region20
      $region19: #{forward.1} parent=11 // pred_region
        _
      $region20: #{forward.1} parent=11 // pred_fallthru
        _
    $region12: #{forward.1} parent=5 // pred_fallthru
      _
    %p462 = scmp.lt.s32.totalorder %s23, 4
    // Predicated region
    $region21: #{forward.1} parent=5 // pred_check
      %p463 = pneg %p462
    $region22: #{forward.1} parent=5 // pred_check_branch
      %465 = sbr.rel (%p463) target = $region24
    $region23: #{forward.1} parent=5 // pred_region
      // Predicated region
      $region25: #{forward.1} parent=23 // pred_check
        %p466 = pneg %p55
      $region26: #{forward.1} parent=23 // pred_check_branch
        %468 = sbr.rel (%p466) target = $region28
      $region27: #{forward.1} parent=23 // pred_region
        %p469 = scmp.lt.s32.totalorder %s30, 1
        %s470 = scalar_select %p469, %s30, 1
        %s471 = smul.addr %s470, 8
        %s472 = scalar_lea.vmem %s0, %s471
      $region28: #{forward.1} parent=23 // pred_fallthru
        _
      // Predicated region
      $region29: #{forward.1} parent=23 // pred_check
        %p473 = pneg %p81
      $region30: #{forward.1} parent=23 // pred_check_branch
        %475 = sbr.rel (%p473) target = $region32
      $region31: #{forward.1} parent=23 // pred_region
        %p476 = scmp.lt.s32.totalorder %s31, 1
        %s477 = scalar_select %p476, %s31, 1
        %s478 = smul.addr %s477, 4
        %s479 = smul.addr %s478, 4
        %s480 = scalar_lea.vmem %s1, %s479
      $region32: #{forward.1} parent=23 // pred_fallthru
        _
      // Predicated region
      $region33: #{forward.1} parent=23 // pred_check
        %p481 = pneg %p107
      $region34: #{forward.1} parent=23 // pred_check_branch
        %483 = sbr.rel (%p481) target = $region36
      $region35: #{forward.1} parent=23 // pred_region
        %p484 = scmp.lt.s32.totalorder %s31, 1
        %s485 = scalar_select %p484, %s31, 1
        %s486 = scalar_lea.vmem %s2, %s485
      $region36: #{forward.1} parent=23 // pred_fallthru
        _
      // Predicated region
      $region37: #{forward.1} parent=23 // pred_check
        %p487 = pneg %p133
      $region38: #{forward.1} parent=23 // pred_check_branch
        %489 = sbr.rel (%p487) target = $region40
      $region39: #{forward.1} parent=23 // pred_region
        %p490 = scmp.lt.s32.totalorder %s31, 1
        %s491 = scalar_select %p490, %s31, 1
        %s492 = smul.addr %s491, 4
        %s493 = smul.addr %s492, 4
        %s494 = scalar_lea.vmem %s3, %s493
      $region40: #{forward.1} parent=23 // pred_fallthru
        _
      // Predicated region
      $region41: #{forward.1} parent=23 // pred_check
        %p495 = pneg %p159
      $region42: #{forward.1} parent=23 // pred_check_branch
        %497 = sbr.rel (%p495) target = $region44
      $region43: #{forward.1} parent=23 // pred_region
        %p498 = scmp.lt.s32.totalorder %s31, 1
        %s499 = scalar_select %p498, %s31, 1
        %s500 = scalar_lea.vmem %s4, %s499
      $region44: #{forward.1} parent=23 // pred_fallthru
        _
      // Predicated region
      $region45: #{forward.1} parent=23 // pred_check
        %p501 = pneg %p185
      $region46: #{forward.1} parent=23 // pred_check_branch
        %503 = sbr.rel (%p501) target = $region48
      $region47: #{forward.1} parent=23 // pred_region
        %p504 = scmp.lt.s32.totalorder %s31, 1
        %s505 = scalar_select %p504, %s31, 1
        %s506 = scalar_lea.vmem %s5, %s505
      $region48: #{forward.1} parent=23 // pred_fallthru
        _
      // Predicated region
      $region49: #{forward.1} parent=23 // pred_check
        %p507 = pneg %p211
      $region50: #{forward.1} parent=23 // pred_check_branch
        %509 = sbr.rel (%p507) target = $region52
      $region51: #{forward.1} parent=23 // pred_region
        %p510 = scmp.lt.s32.totalorder %s31, 1
        %s511 = scalar_select %p510, %s31, 1
        %s512 = scalar_lea.vmem %s6, %s511
      $region52: #{forward.1} parent=23 // pred_fallthru
        _
      // Predicated region
      $region53: #{forward.1} parent=23 // pred_check
        %p513 = pneg %p237
      $region54: #{forward.1} parent=23 // pred_check_branch
        %515 = sbr.rel (%p513) target = $region56
      $region55: #{forward.1} parent=23 // pred_region
        %p516 = scmp.lt.s32.totalorder %s31, 1
        %s517 = scalar_select %p516, %s31, 1
        %s518 = smul.addr %s517, 4
        %s519 = smul.addr %s518, 4
        %s520 = scalar_lea.vmem %s7, %s519
      $region56: #{forward.1} parent=23 // pred_fallthru
        _
      // Predicated region
      $region57: #{forward.1} parent=23 // pred_check
        %p521 = pneg %p263
      $region58: #{forward.1} parent=23 // pred_check_branch
        %523 = sbr.rel (%p521) target = $region60
      $region59: #{forward.1} parent=23 // pred_region
        %p524 = scmp.lt.s32.totalorder %s31, 1
        %s525 = scalar_select %p524, %s31, 1
        %s526 = scalar_lea.vmem %s8, %s525
      $region60: #{forward.1} parent=23 // pred_fallthru
        _
      // Predicated region
      $region61: #{forward.1} parent=23 // pred_check
        %p527 = pneg %p289
      $region62: #{forward.1} parent=23 // pred_check_branch
        %529 = sbr.rel (%p527) target = $region64
      $region63: #{forward.1} parent=23 // pred_region
        %p530 = scmp.lt.s32.totalorder %s31, 1
        %s531 = scalar_select %p530, %s31, 1
        %s532 = smul.addr %s531, 8
        %s533 = smul.addr %s532, 4
        %s534 = scalar_lea.vmem %s9, %s533
      $region64: #{forward.1} parent=23 // pred_fallthru
        _
      // Predicated region
      $region65: #{forward.1} parent=23 // pred_check
        %p535 = pneg %p315
      $region66: #{forward.1} parent=23 // pred_check_branch
        %537 = sbr.rel (%p535) target = $region68
      $region67: #{forward.1} parent=23 // pred_region
        %p538 = scmp.lt.s32.totalorder %s31, 1
        %s539 = scalar_select %p538, %s31, 1
        %s540 = scalar_lea.vmem %s10, %s539
      $region68: #{forward.1} parent=23 // pred_fallthru
        _
      // Predicated region
      $region69: #{forward.1} parent=23 // pred_check
        %p541 = pneg %p341
      $region70: #{forward.1} parent=23 // pred_check_branch
        %543 = sbr.rel (%p541) target = $region72
      $region71: #{forward.1} parent=23 // pred_region
        %p544 = scmp.lt.s32.totalorder %s31, 1
        %s545 = scalar_select %p544, %s31, 1
        %s546 = scalar_lea.vmem %s11, %s545
      $region72: #{forward.1} parent=23 // pred_fallthru
        _
      // Predicated region
      $region73: #{forward.1} parent=23 // pred_check
        %p547 = pneg %p367
      $region74: #{forward.1} parent=23 // pred_check_branch
        %549 = sbr.rel (%p547) target = $region76
      $region75: #{forward.1} parent=23 // pred_region
        %p550 = scmp.lt.s32.totalorder %s31, 1
        %s551 = scalar_select %p550, %s31, 1
        %s552 = scalar_lea.vmem %s12, %s551
      $region76: #{forward.1} parent=23 // pred_fallthru
        _
    $region24: #{forward.1} parent=5 // pred_fallthru
      _
    %p553 = scmp.le.s32.totalorder 1, %s23
    %p554 = scmp.lt.s32.totalorder %s23, 5
    %p555 = pnand %p553, %p554
    %p556 = pneg %p555
    // Predicated region
    $region77: #{forward.1} parent=5 // pred_check
      _
    $region78: #{forward.1} parent=5 // pred_check_branch
      %558 = sbr.rel (%p555) target = $region80
    $region79: #{forward.1} parent=5 // pred_region
      %s559 = ssub.s32 %s23, 1
      %p560 = scmp.lt.s32.totalorder %s32, 1
      %s561 = scalar_select %p560, %s32, 1
      %s562 = smul.addr %s561, 8
      %s563 = scalar_lea.vmem %s0, %s562
      %p564 = pneg %p61
      %p565 = pneg %p58
      %p566 = scmp.lt.s32.totalorder %s33, 1
      %s567 = scalar_select %p566, %s33, 1
      %s568 = smul.addr %s567, 4
      %s569 = smul.addr %s568, 4
      %s570 = scalar_lea.vmem %s1, %s569
      %p571 = pneg %p87
      %p572 = pneg %p84
      %p573 = scmp.lt.s32.totalorder %s33, 1
      %s574 = scalar_select %p573, %s33, 1
      %s575 = scalar_lea.vmem %s2, %s574
      %p576 = pneg %p113
      %p577 = pneg %p110
      %p578 = scmp.lt.s32.totalorder %s33, 1
      %s579 = scalar_select %p578, %s33, 1
      %s580 = smul.addr %s579, 4
      %s581 = smul.addr %s580, 4
      %s582 = scalar_lea.vmem %s3, %s581
      %p583 = pneg %p139
      %p584 = pneg %p136
      %p585 = scmp.lt.s32.totalorder %s33, 1
      %s586 = scalar_select %p585, %s33, 1
      %s587 = scalar_lea.vmem %s4, %s586
      %p588 = pneg %p165
      %p589 = pneg %p162
      %p590 = scmp.lt.s32.totalorder %s33, 1
      %s591 = scalar_select %p590, %s33, 1
      %s592 = scalar_lea.vmem %s5, %s591
      %p593 = pneg %p191
      %p594 = pneg %p188
      %p595 = scmp.lt.s32.totalorder %s33, 1
      %s596 = scalar_select %p595, %s33, 1
      %s597 = scalar_lea.vmem %s6, %s596
      %p598 = pneg %p217
      %p599 = pneg %p214
      %p600 = scmp.lt.s32.totalorder %s33, 1
      %s601 = scalar_select %p600, %s33, 1
      %s602 = smul.addr %s601, 4
      %s603 = smul.addr %s602, 4
      %s604 = scalar_lea.vmem %s7, %s603
      %p605 = pneg %p243
      %p606 = pneg %p240
      %p607 = scmp.lt.s32.totalorder %s33, 1
      %s608 = scalar_select %p607, %s33, 1
      %s609 = scalar_lea.vmem %s8, %s608
      %p610 = pneg %p269
      %p611 = pneg %p266
      %p612 = scmp.lt.s32.totalorder %s33, 1
      %s613 = scalar_select %p612, %s33, 1
      %s614 = smul.addr %s613, 8
      %s615 = smul.addr %s614, 4
      %s616 = scalar_lea.vmem %s9, %s615
      %p617 = pneg %p295
      %p618 = pneg %p292
      %p619 = scmp.lt.s32.totalorder %s33, 1
      %s620 = scalar_select %p619, %s33, 1
      %s621 = scalar_lea.vmem %s10, %s620
      %p622 = pneg %p321
      %p623 = pneg %p318
      %p624 = scmp.lt.s32.totalorder %s33, 1
      %s625 = scalar_select %p624, %s33, 1
      %s626 = scalar_lea.vmem %s11, %s625
      %p627 = pneg %p347
      %p628 = pneg %p344
      %p629 = scmp.lt.s32.totalorder %s33, 1
      %s630 = scalar_select %p629, %s33, 1
      %s631 = scalar_lea.vmem %s12, %s630
      %p632 = pneg %p373
      %p633 = pneg %p370
      %p634 = pneg %p394
      %p635 = pneg %p391
      %p636 = pneg %p415
      %p637 = pneg %p412
      %p638 = pneg %p441
      %p639 = pneg %p438
      %p640 = scmp.lt.s32.totalorder %s32, 1
      %s641 = scalar_select %p640, %s32, 1
      %s642 = scalar_lea.vmem %s15, %s641
      %p643 = scmp.lt.s32.totalorder %s32, 1
      %s644 = scalar_select %p643, %s32, 1
      %s645 = smul.addr %s644, 8
      %s646 = scalar_lea.vmem %s0, %s645
      %p647 = scmp.lt.s32.totalorder %s33, 1
      %s648 = scalar_select %p647, %s33, 1
      %s649 = smul.addr %s648, 4
      %s650 = smul.addr %s649, 4
      %s651 = scalar_lea.vmem %s1, %s650
      %p652 = scmp.lt.s32.totalorder %s33, 1
      %s653 = scalar_select %p652, %s33, 1
      %s654 = scalar_lea.vmem %s2, %s653
      %p655 = scmp.lt.s32.totalorder %s33, 1
      %s656 = scalar_select %p655, %s33, 1
      %s657 = smul.addr %s656, 4
      %s658 = smul.addr %s657, 4
      %s659 = scalar_lea.vmem %s3, %s658
      %p660 = scmp.lt.s32.totalorder %s33, 1
      %s661 = scalar_select %p660, %s33, 1
      %s662 = scalar_lea.vmem %s4, %s661
      %p663 = scmp.lt.s32.totalorder %s33, 1
      %s664 = scalar_select %p663, %s33, 1
      %s665 = scalar_lea.vmem %s5, %s664
      %p666 = scmp.lt.s32.totalorder %s33, 1
      %s667 = scalar_select %p666, %s33, 1
      %s668 = scalar_lea.vmem %s6, %s667
      %p669 = scmp.lt.s32.totalorder %s33, 1
      %s670 = scalar_select %p669, %s33, 1
      %s671 = smul.addr %s670, 4
      %s672 = smul.addr %s671, 4
      %s673 = scalar_lea.vmem %s7, %s672
      %p674 = scmp.lt.s32.totalorder %s33, 1
      %s675 = scalar_select %p674, %s33, 1
      %s676 = scalar_lea.vmem %s8, %s675
      %p677 = scmp.lt.s32.totalorder %s33, 1
      %s678 = scalar_select %p677, %s33, 1
      %s679 = smul.addr %s678, 8
      %s680 = smul.addr %s679, 4
      %s681 = scalar_lea.vmem %s9, %s680
      %p682 = scmp.lt.s32.totalorder %s33, 1
      %s683 = scalar_select %p682, %s33, 1
      %s684 = scalar_lea.vmem %s10, %s683
      %p685 = scmp.lt.s32.totalorder %s33, 1
      %s686 = scalar_select %p685, %s33, 1
      %s687 = scalar_lea.vmem %s11, %s686
      %p688 = scmp.lt.s32.totalorder %s33, 1
      %s689 = scalar_select %p688, %s33, 1
      %s690 = scalar_lea.vmem %s12, %s689
      %p691 = scmp.lt.s32.totalorder %s32, 1
      %s692 = scalar_select %p691, %s32, 1
      %s693 = scalar_lea.vmem %s15, %s692
      %p695 = scmp.eq.s32.totalorder %s33, 0
      // Predicated region
      $region81: #{forward.1} parent=79 // pred_check
        %p696 = pneg %p695
      $region82: #{forward.1} parent=79 // pred_check_branch
        %698 = sbr.rel (%p696) target = $region84
      $region83: #{forward.1} parent=79 // pred_region
        %v699 = vld [vmem:[%s646] sm:$0xff]
        %vm700 = vcmask 261120
        %701 = vst.msk [vmem:[#allocation2] sm:$0xff] %vm700, %v699
      $region84: #{forward.1} parent=79 // pred_fallthru
        _
      %v702 = vld [vmem:[#allocation2] sm:$0xff]
      %v703 = vld [vmem:[%s651] sm:$0xf]
      %v704 = vld [vmem:[%s651 + $0x4] sm:$0xf]
      %v705 = vld [vmem:[%s651 + $0x8] sm:$0xf]
      %v706 = vld [vmem:[%s651 + $0xc] sm:$0xf]
      %v707 = vpack.c.bf16 %v702, %v702
      %v708 = vld [vmem:[%s654] sm:$0x1]
      %v710 = vlaneseq
      %v711 = vshrl.u32 %v710, 7
      %v712 = vsub.s32 0, %v711
      %v713 = vrot.slane %v708, %v712
      %v719 = vunpack.c.l.b16 %v703
      %v720 = vunpack.c.l.b16 %v704
      %v721 = vunpack.c.l.b16 %v705
      %v722 = vunpack.c.l.b16 %v706
      %v723 = vpack.c.b16 %v720, %v719
      %v724 = vpack.c.b16 %v722, %v721
      %vm727 = vcmask 261120
      %v729 = vsel %vm727, %v707, 0
      %731 = vmatprep.subr.bf16.mxu0 0
      %732 = vmatpush1.bf16.msra.mxu0 0
      %733 = vmatprep.subr.bf16.mxu0 0
      %734 = vmatpush1.bf16.msra.mxu0 0
      %735 = vmatprep.subr.bf16.mxu0 0
      %736 = vmatpush1.bf16.msra.mxu0 0
      %737 = vmatprep.subr.bf16.mxu0 0
      %738 = vmatpush1.bf16.msra.mxu0 0
      %739 = vmatprep.subr.bf16.mxu0 0
      %740 = vmatpush1.bf16.msra.mxu0 0
      %741 = vmatprep.subr.bf16.mxu0 0
      %742 = vmatpush1.bf16.msra.mxu0 0
      %743 = vmatprep.subr.bf16.mxu0 0
      %744 = vmatpush1.bf16.msra.mxu0 %v724
      %745 = vmatprep.subr.bf16.mxu0 0
      %746 = vmatpush1.bf16.msra.mxu0 %v723
      %747 = vmatprep.subr.bf16.mxu0 0
      %748 = vmatpush2.bf16.msra.mxu0 0
      %749 = vmatprep.subr.bf16.mxu0 0
      %750 = vmatpush2.bf16.msra.mxu0 0
      %751 = vmatprep.subr.bf16.mxu0 0
      %752 = vmatpush2.bf16.msra.mxu0 0
      %753 = vmatprep.subr.bf16.mxu0 0
      %754 = vmatpush2.bf16.msra.mxu0 0
      %755 = vmatprep.subr.bf16.mxu0 0
      %756 = vmatpush2.bf16.msra.mxu0 0
      %757 = vmatprep.subr.bf16.mxu0 0
      %758 = vmatpush2.bf16.msra.mxu0 0
      %759 = vmatprep.subr.bf16.mxu0 0
      %760 = vmatpush2.bf16.msra.mxu0 0
      %761 = vmatprep.subr.bf16.mxu0 0
      %762 = vmatpush2.bf16.msra.mxu0 0
      %763 = vmatprep.mubr.bf16.mxu0 0
      %764 = vmatmul.mubr.bf16.gmra.mxu0 %v729
      %v765 = vpop.f32.mrf.mxu0
      %v766 = vadd.f32 %v713, %v765
      %v767 = vpop.f32.mrf.mxu0
      %v768 = vpop.f32.mrf.mxu0
      %v769 = vpop.f32.mrf.mxu0
      %770 = vdwg.mxu0
      %v771 = vmul.f32 %v766, 0.35355338
      %v772 = vld [vmem:[%s659] sm:$0xf]
      %v773 = vld [vmem:[%s659 + $0x4] sm:$0xf]
      %v774 = vld [vmem:[%s659 + $0x8] sm:$0xf]
      %v775 = vld [vmem:[%s659 + $0xc] sm:$0xf]
      %777 = vrot.lane.b32.xlu0 %v766, 96
      %v778 = vpop.permute.xlu0 %777
      %vm779 = vcmask 64512
      %v781 = vsel %vm779, %v771, 0
      %v783 = vsel %vm779, %v778, 0
      %785 = vmatprep.subr.mxu0 0.0
      %786 = vmatpush1.xpose.msra.mxu0 0.0
      %787 = vmatprep.subr.mxu0 0.0
      %788 = vmatpush1.xpose.msra.mxu0 0.0
      %789 = vmatprep.subr.mxu0 0.0
      %790 = vmatpush1.xpose.msra.mxu0 0.0
      %791 = vmatprep.subr.mxu0 0.0
      %792 = vmatpush1.xpose.msra.mxu0 0.0
      %793 = vmatprep.subr.mxu0 0.0
      %794 = vmatpush1.xpose.msra.mxu0 0.0
      %795 = vmatprep.subr.mxu0 0.0
      %796 = vmatpush1.xpose.msra.mxu0 0.0
      %797 = vmatprep.subr.mxu0 0.0
      %798 = vmatpush1.xpose.msra.mxu0 0.0
      %799 = vmatprep.subr.mxu0 0.0
      %800 = vmatpush1.xpose.msra.mxu0 0.0
      %801 = vmatprep.subr.mxu0 0.0
      %802 = vmatpush1.xpose.msra.mxu0 0.0
      %803 = vmatprep.subr.mxu0 0.0
      %804 = vmatpush1.xpose.msra.mxu0 0.0
      %805 = vmatprep.subr.mxu0 0.0
      %806 = vmatpush1.xpose.msra.mxu0 0.0
      %807 = vmatprep.subr.mxu0 0.0
      %808 = vmatpush1.xpose.msra.mxu0 0.0
      %809 = vmatprep.subr.mxu0 0.0
      %810 = vmatpush1.xpose.msra.mxu0 0.0
      %811 = vmatprep.subr.mxu0 0.0
      %812 = vmatpush1.xpose.msra.mxu0 0.0
      %813 = vmatprep.subr.mxu0 0.0
      %814 = vmatpush1.xpose.msra.mxu0 0.0
      %815 = vmatprep.subr.mxu0 0.0
      %816 = vmatpush1.xpose.msra.mxu0 %v783
      %817 = vmatprep.subr.mxu0 0.0
      %818 = vmatpush2.xpose.msra.mxu0 0.0
      %819 = vmatprep.subr.mxu0 0.0
      %820 = vmatpush2.xpose.msra.mxu0 0.0
      %821 = vmatprep.subr.mxu0 0.0
      %822 = vmatpush2.xpose.msra.mxu0 0.0
      %823 = vmatprep.subr.mxu0 0.0
      %824 = vmatpush2.xpose.msra.mxu0 0.0
      %825 = vmatprep.subr.mxu0 0.0
      %826 = vmatpush2.xpose.msra.mxu0 0.0
      %827 = vmatprep.subr.mxu0 0.0
      %828 = vmatpush2.xpose.msra.mxu0 0.0
      %829 = vmatprep.subr.mxu0 0.0
      %830 = vmatpush2.xpose.msra.mxu0 0.0
      %831 = vmatprep.subr.mxu0 0.0
      %832 = vmatpush2.xpose.msra.mxu0 0.0
      %833 = vmatprep.subr.mxu0 0.0
      %834 = vmatpush2.xpose.msra.mxu0 0.0
      %835 = vmatprep.subr.mxu0 0.0
      %836 = vmatpush2.xpose.msra.mxu0 0.0
      %837 = vmatprep.subr.mxu0 0.0
      %838 = vmatpush2.xpose.msra.mxu0 0.0
      %839 = vmatprep.subr.mxu0 0.0
      %840 = vmatpush2.xpose.msra.mxu0 0.0
      %841 = vmatprep.subr.mxu0 0.0
      %842 = vmatpush2.xpose.msra.mxu0 0.0
      %843 = vmatprep.subr.mxu0 0.0
      %844 = vmatpush2.xpose.msra.mxu0 0.0
      %845 = vmatprep.subr.mxu0 0.0
      %846 = vmatpush2.xpose.msra.mxu0 0.0
      %847 = vmatprep.subr.mxu0 0.0
      %848 = vmatpush2.xpose.msra.mxu0 0.0
      %849 = vmatprep.mubr.f32.mxu0 0.0
      %850 = vmatmul.mubr.f32.gmra.mxu0 %v781
      %v851 = vpop.f32.mrf.mxu0
      %v852 = vadd.f32 0.0, %v851
      %v853 = vpop.f32.mrf.mxu0
      %854 = vdwg.mxu0
      %v855 = vsel %vm779, %v852, -inf
      %856 = vmax.xlane.f32.xlu0 %v855
      %v857 = vpop.xlane.xlu0 %856
      %v858 = vsub.f32 %v852, %v857
      %v859 = vmul.f32 %v858, 1.442695
      %v860 = vpow.pop %v859
      %v861 = vsel %vm779, %v860, 0.0
      %862 = vadd.xlane.f32.xlu0 %v861
      %v863 = vpop.xlane.xlu0 %862
      %v864 = vrcp.pop %v863
      %v865 = vmul.f32 %v860, %v864
      %866 = vrot.lane.b32.xlu0 %v766, 64
      %v867 = vpop.permute.xlu0 %866
      %v870 = vsel %vm779, %v865, 0
      %872 = vmatprep.subr.mxu0 0.0
      %873 = vmatpush1.msra.mxu0 0.0
      %874 = vmatprep.subr.mxu0 0.0
      %875 = vmatpush1.msra.mxu0 0.0
      %876 = vmatprep.subr.mxu0 0.0
      %877 = vmatpush1.msra.mxu0 0.0
      %878 = vmatprep.subr.mxu0 0.0
      %879 = vmatpush1.msra.mxu0 0.0
      %880 = vmatprep.subr.mxu0 0.0
      %881 = vmatpush1.msra.mxu0 0.0
      %882 = vmatprep.subr.mxu0 0.0
      %883 = vmatpush1.msra.mxu0 0.0
      %884 = vmatprep.subr.mxu0 0.0
      %885 = vmatpush1.msra.mxu0 0.0
      %886 = vmatprep.subr.mxu0 0.0
      %887 = vmatpush1.msra.mxu0 0.0
      %888 = vmatprep.subr.mxu0 0.0
      %889 = vmatpush1.msra.mxu0 0.0
      %890 = vmatprep.subr.mxu0 0.0
      %891 = vmatpush1.msra.mxu0 0.0
      %892 = vmatprep.subr.mxu0 0.0
      %893 = vmatpush1.msra.mxu0 0.0
      %894 = vmatprep.subr.mxu0 0.0
      %895 = vmatpush1.msra.mxu0 0.0
      %896 = vmatprep.subr.mxu0 0.0
      %897 = vmatpush1.msra.mxu0 0.0
      %898 = vmatprep.subr.mxu0 0.0
      %899 = vmatpush1.msra.mxu0 0.0
      %900 = vmatprep.subr.mxu0 0.0
      %901 = vmatpush1.msra.mxu0 0.0
      %902 = vmatprep.subr.mxu0 0.0
      %903 = vmatpush1.msra.mxu0 %v867
      %904 = vmatprep.subr.mxu0 0.0
      %905 = vmatpush2.msra.mxu0 0.0
      %906 = vmatprep.subr.mxu0 0.0
      %907 = vmatpush2.msra.mxu0 0.0
      %908 = vmatprep.subr.mxu0 0.0
      %909 = vmatpush2.msra.mxu0 0.0
      %910 = vmatprep.subr.mxu0 0.0
      %911 = vmatpush2.msra.mxu0 0.0
      %912 = vmatprep.subr.mxu0 0.0
      %913 = vmatpush2.msra.mxu0 0.0
      %914 = vmatprep.subr.mxu0 0.0
      %915 = vmatpush2.msra.mxu0 0.0
      %916 = vmatprep.subr.mxu0 0.0
      %917 = vmatpush2.msra.mxu0 0.0
      %918 = vmatprep.subr.mxu0 0.0
      %919 = vmatpush2.msra.mxu0 0.0
      %920 = vmatprep.subr.mxu0 0.0
      %921 = vmatpush2.msra.mxu0 0.0
      %922 = vmatprep.subr.mxu0 0.0
      %923 = vmatpush2.msra.mxu0 0.0
      %924 = vmatprep.subr.mxu0 0.0
      %925 = vmatpush2.msra.mxu0 0.0
      %926 = vmatprep.subr.mxu0 0.0
      %927 = vmatpush2.msra.mxu0 0.0
      %928 = vmatprep.subr.mxu0 0.0
      %929 = vmatpush2.msra.mxu0 0.0
      %930 = vmatprep.subr.mxu0 0.0
      %931 = vmatpush2.msra.mxu0 0.0
      %932 = vmatprep.subr.mxu0 0.0
      %933 = vmatpush2.msra.mxu0 0.0
      %934 = vmatprep.subr.mxu0 0.0
      %935 = vmatpush2.msra.mxu0 0.0
      %936 = vmatprep.mubr.f32.mxu0 0.0
      %937 = vmatmul.mubr.f32.gmra.mxu0 %v870
      %v938 = vpop.f32.mrf.mxu0
      %v939 = vadd.f32 0.0, %v938
      %v940 = vpop.f32.mrf.mxu0
      %941 = vdwg.mxu0
      %v942 = vpack.c.bf16 %v939, %v939
      %943 = vrot.lane.b32.xlu0 %v771, 120
      %v944 = vpop.permute.xlu0 %943
      %945 = vrot.lane.b32.xlu0 %v766, 88
      %v946 = vpop.permute.xlu0 %945
      %v947 = vsel %vm779, %v944, 0
      %v949 = vsel %vm779, %v946, 0
      %951 = vmatprep.subr.mxu0 0.0
      %952 = vmatpush1.xpose.msra.mxu0 0.0
      %953 = vmatprep.subr.mxu0 0.0
      %954 = vmatpush1.xpose.msra.mxu0 0.0
      %955 = vmatprep.subr.mxu0 0.0
      %956 = vmatpush1.xpose.msra.mxu0 0.0
      %957 = vmatprep.subr.mxu0 0.0
      %958 = vmatpush1.xpose.msra.mxu0 0.0
      %959 = vmatprep.subr.mxu0 0.0
      %960 = vmatpush1.xpose.msra.mxu0 0.0
      %961 = vmatprep.subr.mxu0 0.0
      %962 = vmatpush1.xpose.msra.mxu0 0.0
      %963 = vmatprep.subr.mxu0 0.0
      %964 = vmatpush1.xpose.msra.mxu0 0.0
      %965 = vmatprep.subr.mxu0 0.0
      %966 = vmatpush1.xpose.msra.mxu0 0.0
      %967 = vmatprep.subr.mxu0 0.0
      %968 = vmatpush1.xpose.msra.mxu0 0.0
      %969 = vmatprep.subr.mxu0 0.0
      %970 = vmatpush1.xpose.msra.mxu0 0.0
      %971 = vmatprep.subr.mxu0 0.0
      %972 = vmatpush1.xpose.msra.mxu0 0.0
      %973 = vmatprep.subr.mxu0 0.0
      %974 = vmatpush1.xpose.msra.mxu0 0.0
      %975 = vmatprep.subr.mxu0 0.0
      %976 = vmatpush1.xpose.msra.mxu0 0.0
      %977 = vmatprep.subr.mxu0 0.0
      %978 = vmatpush1.xpose.msra.mxu0 0.0
      %979 = vmatprep.subr.mxu0 0.0
      %980 = vmatpush1.xpose.msra.mxu0 0.0
      %981 = vmatprep.subr.mxu0 0.0
      %982 = vmatpush1.xpose.msra.mxu0 %v949
      %983 = vmatprep.subr.mxu0 0.0
      %984 = vmatpush2.xpose.msra.mxu0 0.0
      %985 = vmatprep.subr.mxu0 0.0
      %986 = vmatpush2.xpose.msra.mxu0 0.0
      %987 = vmatprep.subr.mxu0 0.0
      %988 = vmatpush2.xpose.msra.mxu0 0.0
      %989 = vmatprep.subr.mxu0 0.0
      %990 = vmatpush2.xpose.msra.mxu0 0.0
      %991 = vmatprep.subr.mxu0 0.0
      %992 = vmatpush2.xpose.msra.mxu0 0.0
      %993 = vmatprep.subr.mxu0 0.0
      %994 = vmatpush2.xpose.msra.mxu0 0.0
      %995 = vmatprep.subr.mxu0 0.0
      %996 = vmatpush2.xpose.msra.mxu0 0.0
      %997 = vmatprep.subr.mxu0 0.0
      %998 = vmatpush2.xpose.msra.mxu0 0.0
      %999 = vmatprep.subr.mxu0 0.0
      %1000 = vmatpush2.xpose.msra.mxu0 0.0
      %1001 = vmatprep.subr.mxu0 0.0
      %1002 = vmatpush2.xpose.msra.mxu0 0.0
      %1003 = vmatprep.subr.mxu0 0.0
      %1004 = vmatpush2.xpose.msra.mxu0 0.0
      %1005 = vmatprep.subr.mxu0 0.0
      %1006 = vmatpush2.xpose.msra.mxu0 0.0
      %1007 = vmatprep.subr.mxu0 0.0
      %1008 = vmatpush2.xpose.msra.mxu0 0.0
      %1009 = vmatprep.subr.mxu0 0.0
      %1010 = vmatpush2.xpose.msra.mxu0 0.0
      %1011 = vmatprep.subr.mxu0 0.0
      %1012 = vmatpush2.xpose.msra.mxu0 0.0
      %1013 = vmatprep.subr.mxu0 0.0
      %1014 = vmatpush2.xpose.msra.mxu0 0.0
      %1015 = vmatprep.mubr.f32.mxu0 0.0
      %1016 = vmatmul.mubr.f32.gmra.mxu0 %v947
      %v1017 = vpop.f32.mrf.mxu0
      %v1018 = vadd.f32 0.0, %v1017
      %v1019 = vpop.f32.mrf.mxu0
      %1020 = vdwg.mxu0
      %v1021 = vsel %vm779, %v1018, -inf
      %1022 = vmax.xlane.f32.xlu0 %v1021
      %v1023 = vpop.xlane.xlu0 %1022
      %v1024 = vsub.f32 %v1018, %v1023
      %v1025 = vmul.f32 %v1024, 1.442695
      %v1026 = vpow.pop %v1025
      %v1027 = vsel %vm779, %v1026, 0.0
      %1028 = vadd.xlane.f32.xlu0 %v1027
      %v1029 = vpop.xlane.xlu0 %1028
      %v1030 = vrcp.pop %v1029
      %v1031 = vmul.f32 %v1026, %v1030
      %1032 = vrot.lane.b32.xlu0 %v766, 56
      %v1033 = vpop.permute.xlu0 %1032
      %v1036 = vsel %vm779, %v1031, 0
      %1038 = vmatprep.subr.mxu0 0.0
      %1039 = vmatpush1.msra.mxu0 0.0
      %1040 = vmatprep.subr.mxu0 0.0
      %1041 = vmatpush1.msra.mxu0 0.0
      %1042 = vmatprep.subr.mxu0 0.0
      %1043 = vmatpush1.msra.mxu0 0.0
      %1044 = vmatprep.subr.mxu0 0.0
      %1045 = vmatpush1.msra.mxu0 0.0
      %1046 = vmatprep.subr.mxu0 0.0
      %1047 = vmatpush1.msra.mxu0 0.0
      %1048 = vmatprep.subr.mxu0 0.0
      %1049 = vmatpush1.msra.mxu0 0.0
      %1050 = vmatprep.subr.mxu0 0.0
      %1051 = vmatpush1.msra.mxu0 0.0
      %1052 = vmatprep.subr.mxu0 0.0
      %1053 = vmatpush1.msra.mxu0 0.0
      %1054 = vmatprep.subr.mxu0 0.0
      %1055 = vmatpush1.msra.mxu0 0.0
      %1056 = vmatprep.subr.mxu0 0.0
      %1057 = vmatpush1.msra.mxu0 0.0
      %1058 = vmatprep.subr.mxu0 0.0
      %1059 = vmatpush1.msra.mxu0 0.0
      %1060 = vmatprep.subr.mxu0 0.0
      %1061 = vmatpush1.msra.mxu0 0.0
      %1062 = vmatprep.subr.mxu0 0.0
      %1063 = vmatpush1.msra.mxu0 0.0
      %1064 = vmatprep.subr.mxu0 0.0
      %1065 = vmatpush1.msra.mxu0 0.0
      %1066 = vmatprep.subr.mxu0 0.0
      %1067 = vmatpush1.msra.mxu0 0.0
      %1068 = vmatprep.subr.mxu0 0.0
      %1069 = vmatpush1.msra.mxu0 %v1033
      %1070 = vmatprep.subr.mxu0 0.0
      %1071 = vmatpush2.msra.mxu0 0.0
      %1072 = vmatprep.subr.mxu0 0.0
      %1073 = vmatpush2.msra.mxu0 0.0
      %1074 = vmatprep.subr.mxu0 0.0
      %1075 = vmatpush2.msra.mxu0 0.0
      %1076 = vmatprep.subr.mxu0 0.0
      %1077 = vmatpush2.msra.mxu0 0.0
      %1078 = vmatprep.subr.mxu0 0.0
      %1079 = vmatpush2.msra.mxu0 0.0
      %1080 = vmatprep.subr.mxu0 0.0
      %1081 = vmatpush2.msra.mxu0 0.0
      %1082 = vmatprep.subr.mxu0 0.0
      %1083 = vmatpush2.msra.mxu0 0.0
      %1084 = vmatprep.subr.mxu0 0.0
      %1085 = vmatpush2.msra.mxu0 0.0
      %1086 = vmatprep.subr.mxu0 0.0
      %1087 = vmatpush2.msra.mxu0 0.0
      %1088 = vmatprep.subr.mxu0 0.0
      %1089 = vmatpush2.msra.mxu0 0.0
      %1090 = vmatprep.subr.mxu0 0.0
      %1091 = vmatpush2.msra.mxu0 0.0
      %1092 = vmatprep.subr.mxu0 0.0
      %1093 = vmatpush2.msra.mxu0 0.0
      %1094 = vmatprep.subr.mxu0 0.0
      %1095 = vmatpush2.msra.mxu0 0.0
      %1096 = vmatprep.subr.mxu0 0.0
      %1097 = vmatpush2.msra.mxu0 0.0
      %1098 = vmatprep.subr.mxu0 0.0
      %1099 = vmatpush2.msra.mxu0 0.0
      %1100 = vmatprep.subr.mxu0 0.0
      %1101 = vmatpush2.msra.mxu0 0.0
      %1102 = vmatprep.mubr.f32.mxu0 0.0
      %1103 = vmatmul.mubr.f32.gmra.mxu0 %v1036
      %v1104 = vpop.f32.mrf.mxu0
      %v1105 = vadd.f32 0.0, %v1104
      %v1106 = vpop.f32.mrf.mxu0
      %1107 = vdwg.mxu0
      %v1108 = vpack.c.bf16 %v1105, %v1105
      %v1110 = vsel %vm779, %v1108, 0
      %vm1112 = vcmask 1043456
      %v1114 = vsel %vm1112, %v773, 0
      %1116 = vmatprep.subr.bf16.mxu0 0
      %1117 = vmatpush1.bf16.msra.mxu0 0
      %1118 = vmatprep.subr.bf16.mxu0 0
      %1119 = vmatpush1.bf16.msra.mxu0 0
      %1120 = vmatprep.subr.bf16.mxu0 0
      %1121 = vmatpush1.bf16.msra.mxu0 0
      %1122 = vmatprep.subr.bf16.mxu0 0
      %1123 = vmatpush1.bf16.msra.mxu0 0
      %1124 = vmatprep.subr.bf16.mxu0 0
      %1125 = vmatpush1.bf16.msra.mxu0 0
      %1126 = vmatprep.subr.bf16.mxu0 0
      %1127 = vmatpush1.bf16.msra.mxu0 0
      %1128 = vmatprep.subr.bf16.mxu0 0
      %1129 = vmatpush1.bf16.msra.mxu0 0
      %1130 = vmatprep.subr.bf16.mxu0 0
      %1131 = vmatpush1.bf16.msra.mxu0 %v1114
      %1132 = vmatprep.subr.bf16.mxu0 0
      %1133 = vmatpush2.bf16.msra.mxu0 0
      %1134 = vmatprep.subr.bf16.mxu0 0
      %1135 = vmatpush2.bf16.msra.mxu0 0
      %1136 = vmatprep.subr.bf16.mxu0 0
      %1137 = vmatpush2.bf16.msra.mxu0 0
      %1138 = vmatprep.subr.bf16.mxu0 0
      %1139 = vmatpush2.bf16.msra.mxu0 0
      %1140 = vmatprep.subr.bf16.mxu0 0
      %1141 = vmatpush2.bf16.msra.mxu0 0
      %1142 = vmatprep.subr.bf16.mxu0 0
      %1143 = vmatpush2.bf16.msra.mxu0 0
      %1144 = vmatprep.subr.bf16.mxu0 0
      %1145 = vmatpush2.bf16.msra.mxu0 0
      %1146 = vmatprep.subr.bf16.mxu0 0
      %1147 = vmatpush2.bf16.msra.mxu0 0
      %1148 = vmatprep.mubr.bf16.mxu0 0
      %1149 = vmatmul.mubr.bf16.gmra.mxu0 %v1110
      %v1150 = vpop.f32.mrf.mxu0
      %v1151 = vadd.f32 0.0, %v1150
      %v1152 = vpop.f32.mrf.mxu0
      %v1153 = vpop.f32.mrf.mxu0
      %v1154 = vpop.f32.mrf.mxu0
      %1155 = vdwg.mxu0
      %v1157 = vsel %vm779, %v942, 0
      %v1160 = vsel %vm1112, %v772, 0
      %1162 = vmatprep.subr.bf16.mxu0 0
      %1163 = vmatpush1.bf16.msra.mxu0 0
      %1164 = vmatprep.subr.bf16.mxu0 0
      %1165 = vmatpush1.bf16.msra.mxu0 0
      %1166 = vmatprep.subr.bf16.mxu0 0
      %1167 = vmatpush1.bf16.msra.mxu0 0
      %1168 = vmatprep.subr.bf16.mxu0 0
      %1169 = vmatpush1.bf16.msra.mxu0 0
      %1170 = vmatprep.subr.bf16.mxu0 0
      %1171 = vmatpush1.bf16.msra.mxu0 0
      %1172 = vmatprep.subr.bf16.mxu0 0
      %1173 = vmatpush1.bf16.msra.mxu0 0
      %1174 = vmatprep.subr.bf16.mxu0 0
      %1175 = vmatpush1.bf16.msra.mxu0 0
      %1176 = vmatprep.subr.bf16.mxu0 0
      %1177 = vmatpush1.bf16.msra.mxu0 %v1160
      %1178 = vmatprep.subr.bf16.mxu0 0
      %1179 = vmatpush2.bf16.msra.mxu0 0
      %1180 = vmatprep.subr.bf16.mxu0 0
      %1181 = vmatpush2.bf16.msra.mxu0 0
      %1182 = vmatprep.subr.bf16.mxu0 0
      %1183 = vmatpush2.bf16.msra.mxu0 0
      %1184 = vmatprep.subr.bf16.mxu0 0
      %1185 = vmatpush2.bf16.msra.mxu0 0
      %1186 = vmatprep.subr.bf16.mxu0 0
      %1187 = vmatpush2.bf16.msra.mxu0 0
      %1188 = vmatprep.subr.bf16.mxu0 0
      %1189 = vmatpush2.bf16.msra.mxu0 0
      %1190 = vmatprep.subr.bf16.mxu0 0
      %1191 = vmatpush2.bf16.msra.mxu0 0
      %1192 = vmatprep.subr.bf16.mxu0 0
      %1193 = vmatpush2.bf16.msra.mxu0 0
      %1194 = vmatprep.mubr.bf16.mxu0 0
      %1195 = vmatmul.mubr.bf16.gmra.mxu0 %v1157
      %v1196 = vpop.f32.mrf.mxu0
      %v1197 = vadd.f32 %v1151, %v1196
      %v1198 = vpop.f32.mrf.mxu0
      %v1199 = vpop.f32.mrf.mxu0
      %v1200 = vpop.f32.mrf.mxu0
      %1201 = vdwg.mxu0
      %1202 = vrot.lane.b32.xlu0 %v771, 112
      %v1203 = vpop.permute.xlu0 %1202
      %1204 = vrot.lane.b32.xlu0 %v766, 80
      %v1205 = vpop.permute.xlu0 %1204
      %v1206 = vsel %vm779, %v1203, 0
      %v1208 = vsel %vm779, %v1205, 0
      %1210 = vmatprep.subr.mxu0 0.0
      %1211 = vmatpush1.xpose.msra.mxu0 0.0
      %1212 = vmatprep.subr.mxu0 0.0
      %1213 = vmatpush1.xpose.msra.mxu0 0.0
      %1214 = vmatprep.subr.mxu0 0.0
      %1215 = vmatpush1.xpose.msra.mxu0 0.0
      %1216 = vmatprep.subr.mxu0 0.0
      %1217 = vmatpush1.xpose.msra.mxu0 0.0
      %1218 = vmatprep.subr.mxu0 0.0
      %1219 = vmatpush1.xpose.msra.mxu0 0.0
      %1220 = vmatprep.subr.mxu0 0.0
      %1221 = vmatpush1.xpose.msra.mxu0 0.0
      %1222 = vmatprep.subr.mxu0 0.0
      %1223 = vmatpush1.xpose.msra.mxu0 0.0
      %1224 = vmatprep.subr.mxu0 0.0
      %1225 = vmatpush1.xpose.msra.mxu0 0.0
      %1226 = vmatprep.subr.mxu0 0.0
      %1227 = vmatpush1.xpose.msra.mxu0 0.0
      %1228 = vmatprep.subr.mxu0 0.0
      %1229 = vmatpush1.xpose.msra.mxu0 0.0
      %1230 = vmatprep.subr.mxu0 0.0
      %1231 = vmatpush1.xpose.msra.mxu0 0.0
      %1232 = vmatprep.subr.mxu0 0.0
      %1233 = vmatpush1.xpose.msra.mxu0 0.0
      %1234 = vmatprep.subr.mxu0 0.0
      %1235 = vmatpush1.xpose.msra.mxu0 0.0
      %1236 = vmatprep.subr.mxu0 0.0
      %1237 = vmatpush1.xpose.msra.mxu0 0.0
      %1238 = vmatprep.subr.mxu0 0.0
      %1239 = vmatpush1.xpose.msra.mxu0 0.0
      %1240 = vmatprep.subr.mxu0 0.0
      %1241 = vmatpush1.xpose.msra.mxu0 %v1208
      %1242 = vmatprep.subr.mxu0 0.0
      %1243 = vmatpush2.xpose.msra.mxu0 0.0
      %1244 = vmatprep.subr.mxu0 0.0
      %1245 = vmatpush2.xpose.msra.mxu0 0.0
      %1246 = vmatprep.subr.mxu0 0.0
      %1247 = vmatpush2.xpose.msra.mxu0 0.0
      %1248 = vmatprep.subr.mxu0 0.0
      %1249 = vmatpush2.xpose.msra.mxu0 0.0
      %1250 = vmatprep.subr.mxu0 0.0
      %1251 = vmatpush2.xpose.msra.mxu0 0.0
      %1252 = vmatprep.subr.mxu0 0.0
      %1253 = vmatpush2.xpose.msra.mxu0 0.0
      %1254 = vmatprep.subr.mxu0 0.0
      %1255 = vmatpush2.xpose.msra.mxu0 0.0
      %1256 = vmatprep.subr.mxu0 0.0
      %1257 = vmatpush2.xpose.msra.mxu0 0.0
      %1258 = vmatprep.subr.mxu0 0.0
      %1259 = vmatpush2.xpose.msra.mxu0 0.0
      %1260 = vmatprep.subr.mxu0 0.0
      %1261 = vmatpush2.xpose.msra.mxu0 0.0
      %1262 = vmatprep.subr.mxu0 0.0
      %1263 = vmatpush2.xpose.msra.mxu0 0.0
      %1264 = vmatprep.subr.mxu0 0.0
      %1265 = vmatpush2.xpose.msra.mxu0 0.0
      %1266 = vmatprep.subr.mxu0 0.0
      %1267 = vmatpush2.xpose.msra.mxu0 0.0
      %1268 = vmatprep.subr.mxu0 0.0
      %1269 = vmatpush2.xpose.msra.mxu0 0.0
      %1270 = vmatprep.subr.mxu0 0.0
      %1271 = vmatpush2.xpose.msra.mxu0 0.0
      %1272 = vmatprep.subr.mxu0 0.0
      %1273 = vmatpush2.xpose.msra.mxu0 0.0
      %1274 = vmatprep.mubr.f32.mxu0 0.0
      %1275 = vmatmul.mubr.f32.gmra.mxu0 %v1206
      %v1276 = vpop.f32.mrf.mxu0
      %v1277 = vadd.f32 0.0, %v1276
      %v1278 = vpop.f32.mrf.mxu0
      %1279 = vdwg.mxu0
      %v1280 = vsel %vm779, %v1277, -inf
      %1281 = vmax.xlane.f32.xlu0 %v1280
      %v1282 = vpop.xlane.xlu0 %1281
      %v1283 = vsub.f32 %v1277, %v1282
      %v1284 = vmul.f32 %v1283, 1.442695
      %v1285 = vpow.pop %v1284
      %v1286 = vsel %vm779, %v1285, 0.0
      %1287 = vadd.xlane.f32.xlu0 %v1286
      %v1288 = vpop.xlane.xlu0 %1287
      %v1289 = vrcp.pop %v1288
      %v1290 = vmul.f32 %v1285, %v1289
      %1291 = vrot.lane.b32.xlu0 %v766, 48
      %v1292 = vpop.permute.xlu0 %1291
      %v1295 = vsel %vm779, %v1290, 0
      %1297 = vmatprep.subr.mxu0 0.0
      %1298 = vmatpush1.msra.mxu0 0.0
      %1299 = vmatprep.subr.mxu0 0.0
      %1300 = vmatpush1.msra.mxu0 0.0
      %1301 = vmatprep.subr.mxu0 0.0
      %1302 = vmatpush1.msra.mxu0 0.0
      %1303 = vmatprep.subr.mxu0 0.0
      %1304 = vmatpush1.msra.mxu0 0.0
      %1305 = vmatprep.subr.mxu0 0.0
      %1306 = vmatpush1.msra.mxu0 0.0
      %1307 = vmatprep.subr.mxu0 0.0
      %1308 = vmatpush1.msra.mxu0 0.0
      %1309 = vmatprep.subr.mxu0 0.0
      %1310 = vmatpush1.msra.mxu0 0.0
      %1311 = vmatprep.subr.mxu0 0.0
      %1312 = vmatpush1.msra.mxu0 0.0
      %1313 = vmatprep.subr.mxu0 0.0
      %1314 = vmatpush1.msra.mxu0 0.0
      %1315 = vmatprep.subr.mxu0 0.0
      %1316 = vmatpush1.msra.mxu0 0.0
      %1317 = vmatprep.subr.mxu0 0.0
      %1318 = vmatpush1.msra.mxu0 0.0
      %1319 = vmatprep.subr.mxu0 0.0
      %1320 = vmatpush1.msra.mxu0 0.0
      %1321 = vmatprep.subr.mxu0 0.0
      %1322 = vmatpush1.msra.mxu0 0.0
      %1323 = vmatprep.subr.mxu0 0.0
      %1324 = vmatpush1.msra.mxu0 0.0
      %1325 = vmatprep.subr.mxu0 0.0
      %1326 = vmatpush1.msra.mxu0 0.0
      %1327 = vmatprep.subr.mxu0 0.0
      %1328 = vmatpush1.msra.mxu0 %v1292
      %1329 = vmatprep.subr.mxu0 0.0
      %1330 = vmatpush2.msra.mxu0 0.0
      %1331 = vmatprep.subr.mxu0 0.0
      %1332 = vmatpush2.msra.mxu0 0.0
      %1333 = vmatprep.subr.mxu0 0.0
      %1334 = vmatpush2.msra.mxu0 0.0
      %1335 = vmatprep.subr.mxu0 0.0
      %1336 = vmatpush2.msra.mxu0 0.0
      %1337 = vmatprep.subr.mxu0 0.0
      %1338 = vmatpush2.msra.mxu0 0.0
      %1339 = vmatprep.subr.mxu0 0.0
      %1340 = vmatpush2.msra.mxu0 0.0
      %1341 = vmatprep.subr.mxu0 0.0
      %1342 = vmatpush2.msra.mxu0 0.0
      %1343 = vmatprep.subr.mxu0 0.0
      %1344 = vmatpush2.msra.mxu0 0.0
      %1345 = vmatprep.subr.mxu0 0.0
      %1346 = vmatpush2.msra.mxu0 0.0
      %1347 = vmatprep.subr.mxu0 0.0
      %1348 = vmatpush2.msra.mxu0 0.0
      %1349 = vmatprep.subr.mxu0 0.0
      %1350 = vmatpush2.msra.mxu0 0.0
      %1351 = vmatprep.subr.mxu0 0.0
      %1352 = vmatpush2.msra.mxu0 0.0
      %1353 = vmatprep.subr.mxu0 0.0
      %1354 = vmatpush2.msra.mxu0 0.0
      %1355 = vmatprep.subr.mxu0 0.0
      %1356 = vmatpush2.msra.mxu0 0.0
      %1357 = vmatprep.subr.mxu0 0.0
      %1358 = vmatpush2.msra.mxu0 0.0
      %1359 = vmatprep.subr.mxu0 0.0
      %1360 = vmatpush2.msra.mxu0 0.0
      %1361 = vmatprep.mubr.f32.mxu0 0.0
      %1362 = vmatmul.mubr.f32.gmra.mxu0 %v1295
      %v1363 = vpop.f32.mrf.mxu0
      %v1364 = vadd.f32 0.0, %v1363
      %v1365 = vpop.f32.mrf.mxu0
      %1366 = vdwg.mxu0
      %v1367 = vpack.c.bf16 %v1364, %v1364
      %v1369 = vsel %vm779, %v1367, 0
      %v1372 = vsel %vm1112, %v774, 0
      %1374 = vmatprep.subr.bf16.mxu0 0
      %1375 = vmatpush1.bf16.msra.mxu0 0
      %1376 = vmatprep.subr.bf16.mxu0 0
      %1377 = vmatpush1.bf16.msra.mxu0 0
      %1378 = vmatprep.subr.bf16.mxu0 0
      %1379 = vmatpush1.bf16.msra.mxu0 0
      %1380 = vmatprep.subr.bf16.mxu0 0
      %1381 = vmatpush1.bf16.msra.mxu0 0
      %1382 = vmatprep.subr.bf16.mxu0 0
      %1383 = vmatpush1.bf16.msra.mxu0 0
      %1384 = vmatprep.subr.bf16.mxu0 0
      %1385 = vmatpush1.bf16.msra.mxu0 0
      %1386 = vmatprep.subr.bf16.mxu0 0
      %1387 = vmatpush1.bf16.msra.mxu0 0
      %1388 = vmatprep.subr.bf16.mxu0 0
      %1389 = vmatpush1.bf16.msra.mxu0 %v1372
      %1390 = vmatprep.subr.bf16.mxu0 0
      %1391 = vmatpush2.bf16.msra.mxu0 0
      %1392 = vmatprep.subr.bf16.mxu0 0
      %1393 = vmatpush2.bf16.msra.mxu0 0
      %1394 = vmatprep.subr.bf16.mxu0 0
      %1395 = vmatpush2.bf16.msra.mxu0 0
      %1396 = vmatprep.subr.bf16.mxu0 0
      %1397 = vmatpush2.bf16.msra.mxu0 0
      %1398 = vmatprep.subr.bf16.mxu0 0
      %1399 = vmatpush2.bf16.msra.mxu0 0
      %1400 = vmatprep.subr.bf16.mxu0 0
      %1401 = vmatpush2.bf16.msra.mxu0 0
      %1402 = vmatprep.subr.bf16.mxu0 0
      %1403 = vmatpush2.bf16.msra.mxu0 0
      %1404 = vmatprep.subr.bf16.mxu0 0
      %1405 = vmatpush2.bf16.msra.mxu0 0
      %1406 = vmatprep.mubr.bf16.mxu0 0
      %1407 = vmatmul.mubr.bf16.gmra.mxu0 %v1369
      %v1408 = vpop.f32.mrf.mxu0
      %v1409 = vadd.f32 0.0, %v1408
      %v1410 = vpop.f32.mrf.mxu0
      %v1411 = vpop.f32.mrf.mxu0
      %v1412 = vpop.f32.mrf.mxu0
      %1413 = vdwg.mxu0
      %v1414 = vadd.f32 %v1197, %v1409
      %1415 = vrot.lane.b32.xlu0 %v771, 104
      %v1416 = vpop.permute.xlu0 %1415
      %1417 = vrot.lane.b32.xlu0 %v766, 72
      %v1418 = vpop.permute.xlu0 %1417
      %v1419 = vsel %vm779, %v1416, 0
      %v1421 = vsel %vm779, %v1418, 0
      %1423 = vmatprep.subr.mxu0 0.0
      %1424 = vmatpush1.xpose.msra.mxu0 0.0
      %1425 = vmatprep.subr.mxu0 0.0
      %1426 = vmatpush1.xpose.msra.mxu0 0.0
      %1427 = vmatprep.subr.mxu0 0.0
      %1428 = vmatpush1.xpose.msra.mxu0 0.0
      %1429 = vmatprep.subr.mxu0 0.0
      %1430 = vmatpush1.xpose.msra.mxu0 0.0
      %1431 = vmatprep.subr.mxu0 0.0
      %1432 = vmatpush1.xpose.msra.mxu0 0.0
      %1433 = vmatprep.subr.mxu0 0.0
      %1434 = vmatpush1.xpose.msra.mxu0 0.0
      %1435 = vmatprep.subr.mxu0 0.0
      %1436 = vmatpush1.xpose.msra.mxu0 0.0
      %1437 = vmatprep.subr.mxu0 0.0
      %1438 = vmatpush1.xpose.msra.mxu0 0.0
      %1439 = vmatprep.subr.mxu0 0.0
      %1440 = vmatpush1.xpose.msra.mxu0 0.0
      %1441 = vmatprep.subr.mxu0 0.0
      %1442 = vmatpush1.xpose.msra.mxu0 0.0
      %1443 = vmatprep.subr.mxu0 0.0
      %1444 = vmatpush1.xpose.msra.mxu0 0.0
      %1445 = vmatprep.subr.mxu0 0.0
      %1446 = vmatpush1.xpose.msra.mxu0 0.0
      %1447 = vmatprep.subr.mxu0 0.0
      %1448 = vmatpush1.xpose.msra.mxu0 0.0
      %1449 = vmatprep.subr.mxu0 0.0
      %1450 = vmatpush1.xpose.msra.mxu0 0.0
      %1451 = vmatprep.subr.mxu0 0.0
      %1452 = vmatpush1.xpose.msra.mxu0 0.0
      %1453 = vmatprep.subr.mxu0 0.0
      %1454 = vmatpush1.xpose.msra.mxu0 %v1421
      %1455 = vmatprep.subr.mxu0 0.0
      %1456 = vmatpush2.xpose.msra.mxu0 0.0
      %1457 = vmatprep.subr.mxu0 0.0
      %1458 = vmatpush2.xpose.msra.mxu0 0.0
      %1459 = vmatprep.subr.mxu0 0.0
      %1460 = vmatpush2.xpose.msra.mxu0 0.0
      %1461 = vmatprep.subr.mxu0 0.0
      %1462 = vmatpush2.xpose.msra.mxu0 0.0
      %1463 = vmatprep.subr.mxu0 0.0
      %1464 = vmatpush2.xpose.msra.mxu0 0.0
      %1465 = vmatprep.subr.mxu0 0.0
      %1466 = vmatpush2.xpose.msra.mxu0 0.0
      %1467 = vmatprep.subr.mxu0 0.0
      %1468 = vmatpush2.xpose.msra.mxu0 0.0
      %1469 = vmatprep.subr.mxu0 0.0
      %1470 = vmatpush2.xpose.msra.mxu0 0.0
      %1471 = vmatprep.subr.mxu0 0.0
      %1472 = vmatpush2.xpose.msra.mxu0 0.0
      %1473 = vmatprep.subr.mxu0 0.0
      %1474 = vmatpush2.xpose.msra.mxu0 0.0
      %1475 = vmatprep.subr.mxu0 0.0
      %1476 = vmatpush2.xpose.msra.mxu0 0.0
      %1477 = vmatprep.subr.mxu0 0.0
      %1478 = vmatpush2.xpose.msra.mxu0 0.0
      %1479 = vmatprep.subr.mxu0 0.0
      %1480 = vmatpush2.xpose.msra.mxu0 0.0
      %1481 = vmatprep.subr.mxu0 0.0
      %1482 = vmatpush2.xpose.msra.mxu0 0.0
      %1483 = vmatprep.subr.mxu0 0.0
      %1484 = vmatpush2.xpose.msra.mxu0 0.0
      %1485 = vmatprep.subr.mxu0 0.0
      %1486 = vmatpush2.xpose.msra.mxu0 0.0
      %1487 = vmatprep.mubr.f32.mxu0 0.0
      %1488 = vmatmul.mubr.f32.gmra.mxu0 %v1419
      %v1489 = vpop.f32.mrf.mxu0
      %v1490 = vadd.f32 0.0, %v1489
      %v1491 = vpop.f32.mrf.mxu0
      %1492 = vdwg.mxu0
      %v1493 = vsel %vm779, %v1490, -inf
      %1494 = vmax.xlane.f32.xlu0 %v1493
      %v1495 = vpop.xlane.xlu0 %1494
      %v1496 = vsub.f32 %v1490, %v1495
      %v1497 = vmul.f32 %v1496, 1.442695
      %v1498 = vpow.pop %v1497
      %v1499 = vsel %vm779, %v1498, 0.0
      %1500 = vadd.xlane.f32.xlu0 %v1499
      %v1501 = vpop.xlane.xlu0 %1500
      %v1502 = vrcp.pop %v1501
      %v1503 = vmul.f32 %v1498, %v1502
      %1504 = vrot.lane.b32.xlu0 %v766, 40
      %v1505 = vpop.permute.xlu0 %1504
      %v1508 = vsel %vm779, %v1503, 0
      %1510 = vmatprep.subr.mxu0 0.0
      %1511 = vmatpush1.msra.mxu0 0.0
      %1512 = vmatprep.subr.mxu0 0.0
      %1513 = vmatpush1.msra.mxu0 0.0
      %1514 = vmatprep.subr.mxu0 0.0
      %1515 = vmatpush1.msra.mxu0 0.0
      %1516 = vmatprep.subr.mxu0 0.0
      %1517 = vmatpush1.msra.mxu0 0.0
      %1518 = vmatprep.subr.mxu0 0.0
      %1519 = vmatpush1.msra.mxu0 0.0
      %1520 = vmatprep.subr.mxu0 0.0
      %1521 = vmatpush1.msra.mxu0 0.0
      %1522 = vmatprep.subr.mxu0 0.0
      %1523 = vmatpush1.msra.mxu0 0.0
      %1524 = vmatprep.subr.mxu0 0.0
      %1525 = vmatpush1.msra.mxu0 0.0
      %1526 = vmatprep.subr.mxu0 0.0
      %1527 = vmatpush1.msra.mxu0 0.0
      %1528 = vmatprep.subr.mxu0 0.0
      %1529 = vmatpush1.msra.mxu0 0.0
      %1530 = vmatprep.subr.mxu0 0.0
      %1531 = vmatpush1.msra.mxu0 0.0
      %1532 = vmatprep.subr.mxu0 0.0
      %1533 = vmatpush1.msra.mxu0 0.0
      %1534 = vmatprep.subr.mxu0 0.0
      %1535 = vmatpush1.msra.mxu0 0.0
      %1536 = vmatprep.subr.mxu0 0.0
      %1537 = vmatpush1.msra.mxu0 0.0
      %1538 = vmatprep.subr.mxu0 0.0
      %1539 = vmatpush1.msra.mxu0 0.0
      %1540 = vmatprep.subr.mxu0 0.0
      %1541 = vmatpush1.msra.mxu0 %v1505
      %1542 = vmatprep.subr.mxu0 0.0
      %1543 = vmatpush2.msra.mxu0 0.0
      %1544 = vmatprep.subr.mxu0 0.0
      %1545 = vmatpush2.msra.mxu0 0.0
      %1546 = vmatprep.subr.mxu0 0.0
      %1547 = vmatpush2.msra.mxu0 0.0
      %1548 = vmatprep.subr.mxu0 0.0
      %1549 = vmatpush2.msra.mxu0 0.0
      %1550 = vmatprep.subr.mxu0 0.0
      %1551 = vmatpush2.msra.mxu0 0.0
      %1552 = vmatprep.subr.mxu0 0.0
      %1553 = vmatpush2.msra.mxu0 0.0
      %1554 = vmatprep.subr.mxu0 0.0
      %1555 = vmatpush2.msra.mxu0 0.0
      %1556 = vmatprep.subr.mxu0 0.0
      %1557 = vmatpush2.msra.mxu0 0.0
      %1558 = vmatprep.subr.mxu0 0.0
      %1559 = vmatpush2.msra.mxu0 0.0
      %1560 = vmatprep.subr.mxu0 0.0
      %1561 = vmatpush2.msra.mxu0 0.0
      %1562 = vmatprep.subr.mxu0 0.0
      %1563 = vmatpush2.msra.mxu0 0.0
      %1564 = vmatprep.subr.mxu0 0.0
      %1565 = vmatpush2.msra.mxu0 0.0
      %1566 = vmatprep.subr.mxu0 0.0
      %1567 = vmatpush2.msra.mxu0 0.0
      %1568 = vmatprep.subr.mxu0 0.0
      %1569 = vmatpush2.msra.mxu0 0.0
      %1570 = vmatprep.subr.mxu0 0.0
      %1571 = vmatpush2.msra.mxu0 0.0
      %1572 = vmatprep.subr.mxu0 0.0
      %1573 = vmatpush2.msra.mxu0 0.0
      %1574 = vmatprep.mubr.f32.mxu0 0.0
      %1575 = vmatmul.mubr.f32.gmra.mxu0 %v1508
      %v1576 = vpop.f32.mrf.mxu0
      %v1577 = vadd.f32 0.0, %v1576
      %v1578 = vpop.f32.mrf.mxu0
      %1579 = vdwg.mxu0
      %v1580 = vpack.c.bf16 %v1577, %v1577
      %v1582 = vsel %vm779, %v1580, 0
      %v1585 = vsel %vm1112, %v775, 0
      %1587 = vmatprep.subr.bf16.mxu0 0
      %1588 = vmatpush1.bf16.msra.mxu0 0
      %1589 = vmatprep.subr.bf16.mxu0 0
      %1590 = vmatpush1.bf16.msra.mxu0 0
      %1591 = vmatprep.subr.bf16.mxu0 0
      %1592 = vmatpush1.bf16.msra.mxu0 0
      %1593 = vmatprep.subr.bf16.mxu0 0
      %1594 = vmatpush1.bf16.msra.mxu0 0
      %1595 = vmatprep.subr.bf16.mxu0 0
      %1596 = vmatpush1.bf16.msra.mxu0 0
      %1597 = vmatprep.subr.bf16.mxu0 0
      %1598 = vmatpush1.bf16.msra.mxu0 0
      %1599 = vmatprep.subr.bf16.mxu0 0
      %1600 = vmatpush1.bf16.msra.mxu0 0
      %1601 = vmatprep.subr.bf16.mxu0 0
      %1602 = vmatpush1.bf16.msra.mxu0 %v1585
      %1603 = vmatprep.subr.bf16.mxu0 0
      %1604 = vmatpush2.bf16.msra.mxu0 0
      %1605 = vmatprep.subr.bf16.mxu0 0
      %1606 = vmatpush2.bf16.msra.mxu0 0
      %1607 = vmatprep.subr.bf16.mxu0 0
      %1608 = vmatpush2.bf16.msra.mxu0 0
      %1609 = vmatprep.subr.bf16.mxu0 0
      %1610 = vmatpush2.bf16.msra.mxu0 0
      %1611 = vmatprep.subr.bf16.mxu0 0
      %1612 = vmatpush2.bf16.msra.mxu0 0
      %1613 = vmatprep.subr.bf16.mxu0 0
      %1614 = vmatpush2.bf16.msra.mxu0 0
      %1615 = vmatprep.subr.bf16.mxu0 0
      %1616 = vmatpush2.bf16.msra.mxu0 0
      %1617 = vmatprep.subr.bf16.mxu0 0
      %1618 = vmatpush2.bf16.msra.mxu0 0
      %1619 = vmatprep.mubr.bf16.mxu0 0
      %1620 = vmatmul.mubr.bf16.gmra.mxu0 %v1582
      %v1621 = vpop.f32.mrf.mxu0
      %v1622 = vadd.f32 0.0, %v1621
      %v1623 = vpop.f32.mrf.mxu0
      %v1624 = vpop.f32.mrf.mxu0
      %v1625 = vpop.f32.mrf.mxu0
      %1626 = vdwg.mxu0
      %v1627 = vadd.f32 %v1414, %v1622
      %v1628 = vld [vmem:[%s662] sm:$0x1]
      %v1630 = vlaneseq
      %v1631 = vshrl.u32 %v1630, 7
      %v1632 = vsub.s32 0, %v1631
      %v1633 = vrot.slane %v1628, %v1632
      %v1635 = vadd.f32 %v1627, %v1633
      %v1636 = vadd.f32 %v702, %v1635
      %v1637 = vld [vmem:[%s665] sm:$0x1]
      %v1638 = vld [vmem:[%s668] sm:$0x1]
      %v1639 = vsel %vm727, %v1636, 0.0
      %1640 = vadd.xlane.f32.xlu0 %v1639
      %v1641 = vpop.xlane.xlu0 %1640
      %v1642 = vrcp.pop 32.0
      %v1643 = vmul.f32 %v1641, %v1642
      %v1644 = vsub.f32 %v1636, %v1643
      %v1645 = vmul.f32 %v1644, %v1644
      %v1646 = vsel %vm727, %v1645, 0.0
      %1647 = vadd.xlane.f32.xlu0 %v1646
      %v1648 = vpop.xlane.xlu0 %1647
      %v1649 = vmul.f32 %v1648, %v1642
      %v1650 = vadd.f32 %v1649, 1e-05
      %v1651 = vrsqrt.pop %v1650
      %v1652 = vmul.f32 %v1644, %v1651
      %v1654 = vlaneseq
      %v1655 = vshrl.u32 %v1654, 7
      %v1656 = vsub.s32 0, %v1655
      %v1657 = vrot.slane %v1637, %v1656
      %v1659 = vmul.f32 %v1652, %v1657
      %v1661 = vlaneseq
      %v1662 = vshrl.u32 %v1661, 7
      %v1663 = vsub.s32 0, %v1662
      %v1664 = vrot.slane %v1638, %v1663
      %v1666 = vadd.f32 %v1659, %v1664
      %v1667 = vld [vmem:[%s673] sm:$0xf]
      %v1668 = vld [vmem:[%s673 + $0x4] sm:$0xf]
      %v1669 = vld [vmem:[%s673 + $0x8] sm:$0xf]
      %v1670 = vld [vmem:[%s673 + $0xc] sm:$0xf]
      %v1671 = vld [vmem:[%s681] sm:$0xf]
      %v1672 = vld [vmem:[%s681 + $0x4] sm:$0xf]
      %v1673 = vld [vmem:[%s681 + $0x8] sm:$0xf]
      %v1674 = vld [vmem:[%s681 + $0xc] sm:$0xf]
      %v1675 = vld [vmem:[%s681 + $0x10] sm:$0xf]
      %v1676 = vld [vmem:[%s681 + $0x14] sm:$0xf]
      %v1677 = vld [vmem:[%s681 + $0x18] sm:$0xf]
      %v1678 = vld [vmem:[%s681 + $0x1c] sm:$0xf]
      %v1679 = vpack.c.bf16 %v1666, %v1666
      %v1680 = vld [vmem:[%s676] sm:$0x1]
      %v1682 = vlaneseq
      %v1683 = vshrl.u32 %v1682, 7
      %v1684 = vsub.s32 0, %v1683
      %v1685 = vrot.slane %v1680, %v1684
      %v1691 = vunpack.c.l.b16 %v1667
      %v1692 = vunpack.c.l.b16 %v1668
      %v1693 = vunpack.c.l.b16 %v1669
      %v1694 = vunpack.c.l.b16 %v1670
      %v1695 = vpack.c.b16 %v1692, %v1691
      %v1696 = vpack.c.b16 %v1694, %v1693
      %v1700 = vsel %vm727, %v1679, 0
      %1702 = vmatprep.subr.bf16.mxu0 0
      %1703 = vmatpush1.bf16.msra.mxu0 0
      %1704 = vmatprep.subr.bf16.mxu0 0
      %1705 = vmatpush1.bf16.msra.mxu0 0
      %1706 = vmatprep.subr.bf16.mxu0 0
      %1707 = vmatpush1.bf16.msra.mxu0 0
      %1708 = vmatprep.subr.bf16.mxu0 0
      %1709 = vmatpush1.bf16.msra.mxu0 0
      %1710 = vmatprep.subr.bf16.mxu0 0
      %1711 = vmatpush1.bf16.msra.mxu0 0
      %1712 = vmatprep.subr.bf16.mxu0 0
      %1713 = vmatpush1.bf16.msra.mxu0 0
      %1714 = vmatprep.subr.bf16.mxu0 0
      %1715 = vmatpush1.bf16.msra.mxu0 %v1696
      %1716 = vmatprep.subr.bf16.mxu0 0
      %1717 = vmatpush1.bf16.msra.mxu0 %v1695
      %1718 = vmatprep.subr.bf16.mxu0 0
      %1719 = vmatpush2.bf16.msra.mxu0 0
      %1720 = vmatprep.subr.bf16.mxu0 0
      %1721 = vmatpush2.bf16.msra.mxu0 0
      %1722 = vmatprep.subr.bf16.mxu0 0
      %1723 = vmatpush2.bf16.msra.mxu0 0
      %1724 = vmatprep.subr.bf16.mxu0 0
      %1725 = vmatpush2.bf16.msra.mxu0 0
      %1726 = vmatprep.subr.bf16.mxu0 0
      %1727 = vmatpush2.bf16.msra.mxu0 0
      %1728 = vmatprep.subr.bf16.mxu0 0
      %1729 = vmatpush2.bf16.msra.mxu0 0
      %1730 = vmatprep.subr.bf16.mxu0 0
      %1731 = vmatpush2.bf16.msra.mxu0 0
      %1732 = vmatprep.subr.bf16.mxu0 0
      %1733 = vmatpush2.bf16.msra.mxu0 0
      %1734 = vmatprep.mubr.bf16.mxu0 0
      %1735 = vmatmul.mubr.bf16.gmra.mxu0 %v1700
      %v1736 = vpop.f32.mrf.mxu0
      %v1737 = vadd.f32 %v1685, %v1736
      %v1738 = vpop.f32.mrf.mxu0
      %v1739 = vpop.f32.mrf.mxu0
      %v1740 = vpop.f32.mrf.mxu0
      %1741 = vdwg.mxu0
      %v1742 = vmax.f32 %v1737, 0.0
      %v1743 = vpack.c.bf16 %v1742, %v1742
      %v1744 = vld [vmem:[%s684] sm:$0x1]
      %v1746 = vlaneseq
      %v1747 = vshrl.u32 %v1746, 7
      %v1748 = vsub.s32 0, %v1747
      %v1749 = vrot.slane %v1744, %v1748
      %v1759 = vunpack.c.l.b16 %v1671
      %v1760 = vunpack.c.l.b16 %v1672
      %v1761 = vunpack.c.l.b16 %v1673
      %v1762 = vunpack.c.l.b16 %v1674
      %v1763 = vunpack.c.l.b16 %v1675
      %v1764 = vunpack.c.l.b16 %v1676
      %v1765 = vunpack.c.l.b16 %v1677
      %v1766 = vunpack.c.l.b16 %v1678
      %v1767 = vpack.c.b16 %v1760, %v1759
      %v1768 = vpack.c.b16 %v1762, %v1761
      %v1769 = vpack.c.b16 %v1764, %v1763
      %v1770 = vpack.c.b16 %v1766, %v1765
      %vm1775 = vcmask 523264
      %v1777 = vsel %vm1775, %v1743, 0
      %1779 = vmatprep.subr.bf16.mxu0 0
      %1780 = vmatpush1.bf16.msra.mxu0 0
      %1781 = vmatprep.subr.bf16.mxu0 0
      %1782 = vmatpush1.bf16.msra.mxu0 0
      %1783 = vmatprep.subr.bf16.mxu0 0
      %1784 = vmatpush1.bf16.msra.mxu0 0
      %1785 = vmatprep.subr.bf16.mxu0 0
      %1786 = vmatpush1.bf16.msra.mxu0 0
      %1787 = vmatprep.subr.bf16.mxu0 0
      %1788 = vmatpush1.bf16.msra.mxu0 %v1770
      %1789 = vmatprep.subr.bf16.mxu0 0
      %1790 = vmatpush1.bf16.msra.mxu0 %v1769
      %1791 = vmatprep.subr.bf16.mxu0 0
      %1792 = vmatpush1.bf16.msra.mxu0 %v1768
      %1793 = vmatprep.subr.bf16.mxu0 0
      %1794 = vmatpush1.bf16.msra.mxu0 %v1767
      %1795 = vmatprep.subr.bf16.mxu0 0
      %1796 = vmatpush2.bf16.msra.mxu0 0
      %1797 = vmatprep.subr.bf16.mxu0 0
      %1798 = vmatpush2.bf16.msra.mxu0 0
      %1799 = vmatprep.subr.bf16.mxu0 0
      %1800 = vmatpush2.bf16.msra.mxu0 0
      %1801 = vmatprep.subr.bf16.mxu0 0
      %1802 = vmatpush2.bf16.msra.mxu0 0
      %1803 = vmatprep.subr.bf16.mxu0 0
      %1804 = vmatpush2.bf16.msra.mxu0 0
      %1805 = vmatprep.subr.bf16.mxu0 0
      %1806 = vmatpush2.bf16.msra.mxu0 0
      %1807 = vmatprep.subr.bf16.mxu0 0
      %1808 = vmatpush2.bf16.msra.mxu0 0
      %1809 = vmatprep.subr.bf16.mxu0 0
      %1810 = vmatpush2.bf16.msra.mxu0 0
      %1811 = vmatprep.mubr.bf16.mxu0 0
      %1812 = vmatmul.mubr.bf16.gmra.mxu0 %v1777
      %v1813 = vpop.f32.mrf.mxu0
      %v1814 = vadd.f32 %v1749, %v1813
      %v1815 = vpop.f32.mrf.mxu0
      %v1816 = vpop.f32.mrf.mxu0
      %v1817 = vpop.f32.mrf.mxu0
      %1818 = vdwg.mxu0
      %v1819 = vadd.f32 %v1666, %v1814
      %v1820 = vld [vmem:[%s687] sm:$0x1]
      %v1821 = vld [vmem:[%s690] sm:$0x1]
      %v1822 = vsel %vm727, %v1819, 0.0
      %1823 = vadd.xlane.f32.xlu0 %v1822
      %v1824 = vpop.xlane.xlu0 %1823
      %v1825 = vmul.f32 %v1824, %v1642
      %v1826 = vsub.f32 %v1819, %v1825
      %v1827 = vmul.f32 %v1826, %v1826
      %v1828 = vsel %vm727, %v1827, 0.0
      %1829 = vadd.xlane.f32.xlu0 %v1828
      %v1830 = vpop.xlane.xlu0 %1829
      %v1831 = vmul.f32 %v1830, %v1642
      %v1832 = vadd.f32 %v1831, 1e-05
      %v1833 = vrsqrt.pop %v1832
      %v1834 = vmul.f32 %v1826, %v1833
      %v1836 = vlaneseq
      %v1837 = vshrl.u32 %v1836, 7
      %v1838 = vsub.s32 0, %v1837
      %v1839 = vrot.slane %v1820, %v1838
      %v1841 = vmul.f32 %v1834, %v1839
      %v1843 = vlaneseq
      %v1844 = vshrl.u32 %v1843, 7
      %v1845 = vsub.s32 0, %v1844
      %v1846 = vrot.slane %v1821, %v1845
      %v1848 = vadd.f32 %v1841, %v1846
      %1849 = vst.msk [vmem:[#allocation2] sm:$0xff] %vm727, %v1848
      %p1850 = scmp.eq.s32.totalorder %s33, 1
      // Predicated region
      $region85: #{forward.1} parent=79 // pred_check
        %p1851 = pneg %p1850
      $region86: #{forward.1} parent=79 // pred_check_branch
        %1853 = sbr.rel (%p1851) target = $region88
      $region87: #{forward.1} parent=79 // pred_region
        %v1854 = vld [vmem:[%s13] sm:$0xff]
        %v1855 = vld [vmem:[%s13 + $0x8] sm:$0xff]
        %v1856 = vld [vmem:[%s13 + $0x10] sm:$0xff]
        %v1857 = vld [vmem:[%s13 + $0x18] sm:$0xff]
        %v1859 = vsel %vm727, %v1848, 0
        %1861 = vmatprep.subr.mxu0 0.0
        %1862 = vmatpush1.msra.mxu0 0.0
        %1863 = vmatprep.subr.mxu0 0.0
        %1864 = vmatpush1.msra.mxu0 0.0
        %1865 = vmatprep.subr.mxu0 0.0
        %1866 = vmatpush1.msra.mxu0 0.0
        %1867 = vmatprep.subr.mxu0 0.0
        %1868 = vmatpush1.msra.mxu0 0.0
        %1869 = vmatprep.subr.mxu0 0.0
        %1870 = vmatpush1.msra.mxu0 0.0
        %1871 = vmatprep.subr.mxu0 0.0
        %1872 = vmatpush1.msra.mxu0 0.0
        %1873 = vmatprep.subr.mxu0 0.0
        %1874 = vmatpush1.msra.mxu0 0.0
        %1875 = vmatprep.subr.mxu0 0.0
        %1876 = vmatpush1.msra.mxu0 0.0
        %1877 = vmatprep.subr.mxu0 0.0
        %1878 = vmatpush1.msra.mxu0 0.0
        %1879 = vmatprep.subr.mxu0 0.0
        %1880 = vmatpush1.msra.mxu0 0.0
        %1881 = vmatprep.subr.mxu0 0.0
        %1882 = vmatpush1.msra.mxu0 0.0
        %1883 = vmatprep.subr.mxu0 0.0
        %1884 = vmatpush1.msra.mxu0 0.0
        %1885 = vmatprep.subr.mxu0 0.0
        %1886 = vmatpush1.msra.mxu0 %v1857
        %1887 = vmatprep.subr.mxu0 0.0
        %1888 = vmatpush1.msra.mxu0 %v1856
        %1889 = vmatprep.subr.mxu0 0.0
        %1890 = vmatpush1.msra.mxu0 %v1855
        %1891 = vmatprep.subr.mxu0 0.0
        %1892 = vmatpush1.msra.mxu0 %v1854
        %1893 = vmatprep.subr.mxu0 0.0
        %1894 = vmatpush2.msra.mxu0 0.0
        %1895 = vmatprep.subr.mxu0 0.0
        %1896 = vmatpush2.msra.mxu0 0.0
        %1897 = vmatprep.subr.mxu0 0.0
        %1898 = vmatpush2.msra.mxu0 0.0
        %1899 = vmatprep.subr.mxu0 0.0
        %1900 = vmatpush2.msra.mxu0 0.0
        %1901 = vmatprep.subr.mxu0 0.0
        %1902 = vmatpush2.msra.mxu0 0.0
        %1903 = vmatprep.subr.mxu0 0.0
        %1904 = vmatpush2.msra.mxu0 0.0
        %1905 = vmatprep.subr.mxu0 0.0
        %1906 = vmatpush2.msra.mxu0 0.0
        %1907 = vmatprep.subr.mxu0 0.0
        %1908 = vmatpush2.msra.mxu0 0.0
        %1909 = vmatprep.subr.mxu0 0.0
        %1910 = vmatpush2.msra.mxu0 0.0
        %1911 = vmatprep.subr.mxu0 0.0
        %1912 = vmatpush2.msra.mxu0 0.0
        %1913 = vmatprep.subr.mxu0 0.0
        %1914 = vmatpush2.msra.mxu0 0.0
        %1915 = vmatprep.subr.mxu0 0.0
        %1916 = vmatpush2.msra.mxu0 0.0
        %1917 = vmatprep.subr.mxu0 0.0
        %1918 = vmatpush2.msra.mxu0 0.0
        %1919 = vmatprep.subr.mxu0 0.0
        %1920 = vmatpush2.msra.mxu0 0.0
        %1921 = vmatprep.subr.mxu0 0.0
        %1922 = vmatpush2.msra.mxu0 0.0
        %1923 = vmatprep.subr.mxu0 0.0
        %1924 = vmatpush2.msra.mxu0 0.0
        %1925 = vmatprep.mubr.f32.mxu0 0.0
        %1926 = vmatmul.mubr.f32.gmra.mxu0 %v1859
        %v1927 = vpop.f32.mrf.mxu0
        %v1928 = vadd.f32 0.0, %v1927
        %v1929 = vpop.f32.mrf.mxu0
        %1930 = vdwg.mxu0
        %vm1931 = vcmask 7168
        %v1932 = vsel %vm1931, %v1928, 0.0
        %v1933 = vrot.slane %v1932, 4
        %v1934 = vadd.f32 %v1932, %v1933
        %v1935 = vrot.slane %v1934, 2
        %v1936 = vadd.f32 %v1934, %v1935
        %v1937 = vrot.slane %v1936, 1
        %v1938 = vadd.f32 %v1936, %v1937
        %v1939 = vmul.f32 %v1938, 0.125
        %v1940 = vld [vmem:[#allocation3] sm:$0x1]
        %v1941 = vadd.f32 %v1939, %v1940
        %v1942 = vsub.f32 0.0, %v1941
        %v1943 = vmul.f32 %v1942, 1.442695
        %v1944 = vpow.pop %v1943
        %v1945 = vadd.f32 %v1944, 1.0
        %v1946 = vrcp.pop %v1945
        %v1947 = vmul.f32 1.0, %v1946
        %vm1948 = vcmask 0
        %1949 = vst.msk [vmem:[%s693] sm:$0x1] %vm1948, %v1947
      $region88: #{forward.1} parent=79 // pred_fallthru
        _
      %p1950 = scmp.lt.s32.totalorder %s32, 1
      %s1951 = scalar_select %p1950, %s32, 1
      %s1952 = scalar_lea.vmem %s15, %s1951
      // Predicated region
      $region89: #{forward.1} parent=79 // pred_check
        %p1953 = pneg %p438
      $region90: #{forward.1} parent=79 // pred_check_branch
        %1955 = sbr.rel (%p1953) target = $region92
      $region91: #{forward.1} parent=79 // pred_region
        _
      $region92: #{forward.1} parent=79 // pred_fallthru
        _
    $region80: #{forward.1} parent=5 // pred_fallthru
      _
    %p1956 = scmp.le.s32.totalorder 2, %s23
    // Predicated region
    $region93: #{forward.1} parent=5 // pred_check
      %p1957 = pneg %p1956
    $region94: #{forward.1} parent=5 // pred_check_branch
      %1959 = sbr.rel (%p1957) target = $region96
    $region95: #{forward.1} parent=5 // pred_region
      %s1960 = ssub.s32 %s23, 2
      // Predicated region
      $region97: #{forward.1} parent=95 // pred_check
        %p1961 = pneg %p444
      $region98: #{forward.1} parent=95 // pred_check_branch
        %1963 = sbr.rel (%p1961) target = $region100
      $region99: #{forward.1} parent=95 // pred_region
        %p1964 = scmp.lt.s32.totalorder %s34, 1
        %s1965 = scalar_select %p1964, %s34, 1
        %s1966 = scalar_lea.vmem %s15, %s1965
      $region100: #{forward.1} parent=95 // pred_fallthru
        _
    $region96: #{forward.1} parent=5 // pred_fallthru
      _
  $region6: #{forward.1} parent=0 // loop_footer
    %s27 = sadd.s32 1, %s23
  $region7: #{forward.1} parent=0 // loop_footer_branch
    %22 = sbr.rel target = $region3
  $region8: #{forward.1} parent=0 // loop_exit
    _

</llo_original>
